<compile_context>
chip_gen: v5e
topology: v5e:2x2
jax: 0.10.0
libtpu: 0.0.40
codegen_flags: <defaults>
</compile_context>

<pallas_src>
import functools

import jax
import jax.numpy as jnp
from jax import lax
from jax.experimental import pallas as pl
from jax.experimental.pallas import tpu as pltpu


# ---------------------------------------------------------------------------
# In-kernel math helpers (traced inside the Pallas kernel)
# ---------------------------------------------------------------------------
def _rms_norm(x):
    # x / sqrt(mean(x^2)) via rsqrt (EUP slot).
    return x * lax.rsqrt(jnp.mean(jnp.square(x), axis=-1, keepdims=True))


def _sigmoid(x):
    # sigmoid via the EUP tanh unit: exact-precision, no VALU divide.
    return 0.5 * (jnp.tanh(0.5 * x) + 1.0)


def _silu(x):
    return x * _sigmoid(x)


# ---------------------------------------------------------------------------
# Fused VLVAE kernel:
#   patch-embed -> encoder layers -> (store z) -> decoder layers -> unembed.
# grid = (row_blocks,): axis 0 splits the B*L token rows ("parallel"; feeds
# v7x's two TensorCores, degenerates to a single step on v5e/v6e).  All layers
# run inside the kernel as a statically unrolled loop with x as a loop carry.
# ---------------------------------------------------------------------------
def vlvae_kernel(patches_ref, wpe_ref, bpe_ref, pos_ref, seg_ref,
                 wq_ref, wo_ref, wm1_ref, bm1_ref, wm2_ref, bm2_ref,
                 wpu_ref, bpu_ref, z_ref, rec_ref, *,
                 n_enc_layers, n_layers):
    # ---- patch embedding (Conv2d k=P stride=P == per-patch linear) + pos ----
    x = (jnp.dot(patches_ref[...], wpe_ref[...],
                 preferred_element_type=jnp.float32)
         + bpe_ref[...] + pos_ref[...])                     # (R, E) float32

    seg = seg_ref[...]                                      # (E, E) block-diag ones

    for l in range(n_layers):                               # statically unrolled
        # ---- attention branch: x = x + Attention(rms_norm(x)) ----
        # linear_attention collapses exactly to a per-head softmax of q/4
        # (the sum over the softmax axis of softmax(k^T v) == 1), so k/v are
        # never computed.
        xn = _rms_norm(x)
        q = jnp.dot(xn, wq_ref[l], preferred_element_type=jnp.float32) * 0.25
        # Segmented (per-head) softmax.  A single row-wide max is a valid
        # shift constant (it only needs to be shared within each head
        # segment); for sanely-scaled activations no segment underflows.
        m = jnp.max(q, axis=-1, keepdims=True)
        e = jnp.exp(q - m)
        denom = jnp.dot(e, seg, preferred_element_type=jnp.float32)
        att = e * pl.reciprocal(denom, approx=True)
        x = x + jnp.dot(att, wo_ref[l], preferred_element_type=jnp.float32)

        # ---- mlp branch: x = x + MLP(rms_norm(x)) ----
        xn = _rms_norm(x)
        h1 = _silu(jnp.dot(xn, wm1_ref[l], preferred_element_type=jnp.float32)
                   + bm1_ref[l])
        h2 = _silu(jnp.dot(h1, wm2_ref[l], preferred_element_type=jnp.float32)
                   + bm2_ref[l])
        x = x + h2

        # ---- latent output after the encoder stack (stored once) ----
        if l == n_enc_layers - 1:
            z_ref[...] = x

    # ---- patch un-embedding + sigmoid after the decoder stack ----
    y = (jnp.dot(x, wpu_ref[...], preferred_element_type=jnp.float32)
         + bpu_ref[...])
    rec_ref[...] = _sigmoid(y)


# ---------------------------------------------------------------------------
# One-time parameter packing (hoisted out of the jitted per-call path):
# enc/dec stacking, q-projection slice, per-head segment matrix, pos tiling.
# ---------------------------------------------------------------------------
def pack_vlvae_params(params, *, B, L, heads):
    E = params["w_pe"].shape[1]
    hd = E // heads

    def cat(name):
        return jnp.concatenate([params["enc"][name], params["dec"][name]], 0)

    lane = jnp.arange(E)
    return {
        "w_pe": params["w_pe"],
        "b_pe": params["b_pe"],
        "pos": jnp.tile(params["pos"][:L], (B, 1)),          # (B*L, E), packed once
        "seg": (lane[:, None] // hd == lane[None, :] // hd).astype(jnp.float32),
        "wq": cat("wqkv")[:, :, :E],                          # only q is needed
        "wo": cat("wo"),
        "wm1": cat("wm1"),
        "bm1": cat("bm1"),
        "wm2": cat("wm2"),
        "bm2": cat("bm2"),
        "w_pu": params["w_pu"],
        "b_pu": params["b_pu"],
    }


def _num_tensorcores():
    """row_blocks should match the TensorCore count: 2 on v7x, else 1."""
    try:
        kind = jax.devices()[0].device_kind.lower()
    except Exception:
        return 1
    return 2 if ("v7" in kind or "7x" in kind) else 1


# ---------------------------------------------------------------------------
# Wrapper: patchify / single pallas_call / un-patchify
# ---------------------------------------------------------------------------
def vlvae_forward(img, p, *, patch_size, n_enc_layers, row_blocks=None):
    B, C, H, W = img.shape
    P = patch_size
    hg, wg = H // P, W // P
    L = hg * wg
    K = C * P * P
    E = p["w_pe"].shape[1]
    BL = B * L

    if row_blocks is None:
        row_blocks = _num_tensorcores()
    if BL % (8 * row_blocks) != 0:          # keep sublane-aligned row blocks
        row_blocks = 1
    R = BL // row_blocks

    # patchify == Conv2d(k=P, stride=P); patch vector index = c*P*P + ph*P + pw
    patches = img.reshape(B, C, hg, P, wg, P).transpose(0, 2, 4, 1, 3, 5)
    patches = patches.reshape(BL, K)

    TL = p["wq"].shape[0]
    E3 = 3 * E

    z_flat, rec_flat = pl.pallas_call(
        functools.partial(vlvae_kernel, n_enc_layers=n_enc_layers, n_layers=TL),
        out_shape=(jax.ShapeDtypeStruct((BL, E), jnp.float32),
                   jax.ShapeDtypeStruct((BL, K), jnp.float32)),
        grid_spec=pltpu.PrefetchScalarGridSpec(
            num_scalar_prefetch=0,
            grid=(row_blocks,),
            in_specs=[
                pl.BlockSpec((R, K), lambda r: (r, 0)),            # patches
                pl.BlockSpec((K, E), lambda r: (0, 0)),            # w_pe
                pl.BlockSpec((1, E), lambda r: (0, 0)),            # b_pe
                pl.BlockSpec((R, E), lambda r: (r, 0)),            # pos
                pl.BlockSpec((E, E), lambda r: (0, 0)),            # seg
                pl.BlockSpec((TL, E, E), lambda r: (0, 0, 0)),     # wq (all layers)
                pl.BlockSpec((TL, E, E), lambda r: (0, 0, 0)),     # wo
                pl.BlockSpec((TL, E, E3), lambda r: (0, 0, 0)),    # wm1
                pl.BlockSpec((TL, 1, E3), lambda r: (0, 0, 0)),    # bm1
                pl.BlockSpec((TL, E3, E), lambda r: (0, 0, 0)),    # wm2
                pl.BlockSpec((TL, 1, E), lambda r: (0, 0, 0)),     # bm2
                pl.BlockSpec((E, K), lambda r: (0, 0)),            # w_pu
                pl.BlockSpec((1, K), lambda r: (0, 0)),            # b_pu
            ],
            out_specs=[
                pl.BlockSpec((R, E), lambda r: (r, 0)),            # z
                pl.BlockSpec((R, K), lambda r: (r, 0)),            # rec patches
            ],
        ),
        compiler_params=pltpu.CompilerParams(
            dimension_semantics=("parallel",)),
    )(patches, p["w_pe"], p["b_pe"], p["pos"], p["seg"],
      p["wq"], p["wo"], p["wm1"], p["bm1"], p["wm2"], p["bm2"],
      p["w_pu"], p["b_pu"])

    z = z_flat.reshape(B, L, E)
    # un-patchify == ConvTranspose2d(k=P, stride=P)
    x_rec = rec_flat.reshape(B, hg, wg, C, P, P).transpose(0, 3, 1, 4, 2, 5)
    x_rec = x_rec.reshape(B, C, H, W)
    return x_rec, z


# ---------------------------------------------------------------------------
# Pure-JAX reference (faithful transcription of the PyTorch module, full
# linear_attention math with k/v) for validation.
# ---------------------------------------------------------------------------
def ref_forward(img, params, *, heads, patch_size):
    B, C, H, W = img.shape
    P = patch_size
    hg, wg = H // P, W // P
    L = hg * wg
    patches = img.reshape(B, C, hg, P, wg, P).transpose(0, 2, 4, 1, 3, 5)
    patches = patches.reshape(B, L, C * P * P)
    x = patches @ params["w_pe"] + params["b_pe"] + params["pos"][:L]

    def run_transformer(x, p):
        n_layers = p["wqkv"].shape[0]
        Bq, S, E = x.shape
        hd = E // heads
        for l in range(n_layers):
            xn = x / jnp.sqrt(jnp.mean(jnp.square(x), axis=-1, keepdims=True))
            qkv = (xn @ p["wqkv"][l]).reshape(Bq, S, 3, heads, hd)
            q = jnp.transpose(qkv[:, :, 0], (0, 2, 1, 3))
            k = jnp.transpose(qkv[:, :, 1], (0, 2, 1, 3))
            v = jnp.transpose(qkv[:, :, 2], (0, 2, 1, 3))
            score = jax.nn.softmax(jnp.einsum('bhnk,bhnc->bhkc', k / 4, v), axis=-1)
            a = jax.nn.softmax(jnp.einsum('bhnk,bhkc->bhnk', q / 4, score), axis=-1)
            a = jnp.transpose(a, (0, 2, 1, 3)).reshape(Bq, S, E)
            x = x + a @ p["wo"][l]
            xn = x / jnp.sqrt(jnp.mean(jnp.square(x), axis=-1, keepdims=True))
            h1 = jax.nn.silu(xn @ p["wm1"][l] + p["bm1"][l])
            h2 = jax.nn.silu(h1 @ p["wm2"][l] + p["bm2"][l])
            x = x + h2
        return x

    z = run_transformer(x, params["enc"])
    zd = run_transformer(z, params["dec"])
    out_patches = jax.nn.sigmoid(zd @ params["w_pu"] + params["b_pu"])
    x_rec = out_patches.reshape(B, hg, wg, C, P, P).transpose(0, 3, 1, 4, 2, 5)
    return x_rec.reshape(B, C, H, W), z


# ---------------------------------------------------------------------------
# Deterministic synthetic parameters (shapes follow the nn.Module __init__)
# ---------------------------------------------------------------------------
def make_params(key, *, E, layers, P):
    C = 3
    K = C * P * P
    ks = jax.random.split(key, 7)

    def tparams(k):
        kk = jax.random.split(k, 6)
        return {
            "wqkv": 0.08 * jax.random.normal(kk[0], (layers, E, 3 * E), jnp.float32),
            "wo":   0.08 * jax.random.normal(kk[1], (layers, E, E), jnp.float32),
            "wm1":  0.08 * jax.random.normal(kk[2], (layers, E, 3 * E), jnp.float32),
            "bm1":  0.02 * jax.random.normal(kk[3], (layers, 1, 3 * E), jnp.float32),
            "wm2":  0.08 * jax.random.normal(kk[4], (layers, 3 * E, E), jnp.float32),
            "bm2":  0.02 * jax.random.normal(kk[5], (layers, 1, E), jnp.float32),
        }

    b3 = 0.02 * jax.random.normal(ks[4], (C,), jnp.float32)   # ConvTranspose bias (3,)
    return {
        # Conv2d(3, E, P, P) weight (E, 3, P, P) stored flattened+transposed: (3*P*P, E)
        "w_pe": 0.08 * jax.random.normal(ks[0], (K, E), jnp.float32),
        "b_pe": 0.02 * jax.random.normal(ks[1], (1, E), jnp.float32),
        "pos":  0.02 * jax.random.normal(ks[2], (1024, E), jnp.float32),
        # ConvTranspose2d(E, 3, P, P) weight (E, 3, P, P) stored flattened: (E, 3*P*P)
        "w_pu": 0.08 * jax.random.normal(ks[3], (E, K), jnp.float32),
        "b_pu": jnp.repeat(b3, P * P).reshape(1, K),
        "enc": tparams(ks[5]),
        "dec": tparams(ks[6]),
    }


if __name__ == "__main__":
    E, heads, layers, P = 32, 4, 2, 4
    B, H, W = 2, 16, 16
    L = (H // P) * (W // P)

    key = jax.random.PRNGKey(0)
    kp, kx = jax.random.split(key)
    params = make_params(kp, E=E, layers=layers, P=P)
    img = jax.random.uniform(kx, (B, 3, H, W), jnp.float32)

    # Pack / concatenate / tile parameters ONCE, outside the hot call path.
    packed = pack_vlvae_params(params, B=B, L=L, heads=heads)
    jax.block_until_ready(packed)

    fwd = jax.jit(functools.partial(vlvae_forward, patch_size=P,
                                    n_enc_layers=layers))
    x_rec, z = fwd(img, packed)
    jax.block_until_ready((x_rec, z))

    x_ref, z_ref = ref_forward(img, params, heads=heads, patch_size=P)
    assert x_rec.shape == (B, 3, H, W)
    assert z.shape == (B, L, E)
    assert jnp.allclose(z, z_ref, atol=2e-3, rtol=2e-3), \
        float(jnp.max(jnp.abs(z - z_ref)))
    assert jnp.allclose(x_rec, x_ref, atol=2e-3, rtol=2e-3), \
        float(jnp.max(jnp.abs(x_rec - x_ref)))
    print("KERNEL_OK")
</pallas_src>

<mosaic_0001>
module attributes {stable_mosaic.version = 11 : i64} {
  func.func @vlvae_kernel(%arg0: i32, %arg1: memref<32x48xf32, #tpu.memory_space<vmem>>, %arg2: memref<48x32xf32, #tpu.memory_space<vmem>>, %arg3: memref<1x32xf32, #tpu.memory_space<vmem>>, %arg4: memref<32x32xf32, #tpu.memory_space<vmem>>, %arg5: memref<32x32xf32, #tpu.memory_space<vmem>>, %arg6: memref<4x32x32xf32, #tpu.memory_space<vmem>>, %arg7: memref<4x32x32xf32, #tpu.memory_space<vmem>>, %arg8: memref<4x32x96xf32, #tpu.memory_space<vmem>>, %arg9: memref<4x1x96xf32, #tpu.memory_space<vmem>>, %arg10: memref<4x96x32xf32, #tpu.memory_space<vmem>>, %arg11: memref<4x1x32xf32, #tpu.memory_space<vmem>>, %arg12: memref<32x48xf32, #tpu.memory_space<vmem>>, %arg13: memref<1x48xf32, #tpu.memory_space<vmem>>, %arg14: memref<32x32xf32, #tpu.memory_space<vmem>>, %arg15: memref<32x48xf32, #tpu.memory_space<vmem>>) attributes {dimension_semantics = [#tpu.dimension_semantics<parallel>], iteration_bounds = array<i64: 1>, scalar_prefetch = 0 : i64, scratch_operands = 0 : i64, tpu.core_type = #tpu.core_type<tc>, window_params = [{transform_indices = @transform_0, window_bounds = array<i64: 32, 48>}, {pipeline_mode = #tpu.pipeline_mode<synchronous>, transform_indices = @transform_1, window_bounds = array<i64: 48, 32>}, {pipeline_mode = #tpu.pipeline_mode<synchronous>, transform_indices = @transform_2, window_bounds = array<i64: 1, 32>}, {transform_indices = @transform_3, window_bounds = array<i64: 32, 32>}, {pipeline_mode = #tpu.pipeline_mode<synchronous>, transform_indices = @transform_4, window_bounds = array<i64: 32, 32>}, {pipeline_mode = #tpu.pipeline_mode<synchronous>, transform_indices = @transform_5, window_bounds = array<i64: 4, 32, 32>}, {pipeline_mode = #tpu.pipeline_mode<synchronous>, transform_indices = @transform_6, window_bounds = array<i64: 4, 32, 32>}, {pipeline_mode = #tpu.pipeline_mode<synchronous>, transform_indices = @transform_7, window_bounds = array<i64: 4, 32, 96>}, {pipeline_mode = #tpu.pipeline_mode<synchronous>, transform_indices = @transform_8, window_bounds = array<i64: 4, 1, 96>}, {pipeline_mode = #tpu.pipeline_mode<synchronous>, transform_indices = @transform_9, window_bounds = array<i64: 4, 96, 32>}, {pipeline_mode = #tpu.pipeline_mode<synchronous>, transform_indices = @transform_10, window_bounds = array<i64: 4, 1, 32>}, {pipeline_mode = #tpu.pipeline_mode<synchronous>, transform_indices = @transform_11, window_bounds = array<i64: 32, 48>}, {pipeline_mode = #tpu.pipeline_mode<synchronous>, transform_indices = @transform_12, window_bounds = array<i64: 1, 48>}, {transform_indices = @transform_13, window_bounds = array<i64: 32, 32>}, {transform_indices = @transform_14, window_bounds = array<i64: 32, 48>}]} {
    %c0 = arith.constant 0 : index
    %c0_0 = arith.constant 0 : index
    %0 = vector.load %arg1[%c0, %c0_0] : memref<32x48xf32, #tpu.memory_space<vmem>>, vector<32x48xf32>
    %c0_1 = arith.constant 0 : index
    %c0_2 = arith.constant 0 : index
    %1 = vector.load %arg2[%c0_1, %c0_2] : memref<48x32xf32, #tpu.memory_space<vmem>>, vector<48x32xf32>
    %cst = arith.constant dense<0.000000e+00> : vector<32x32xf32>
    %2 = tpu.matmul %0, %1, %cst {dimension_numbers = #tpu.dot_dimension_numbers<[1], [0], [0], [1], [0, 0, 1, 1], [], []>} : vector<32x48xf32>, vector<48x32xf32>, vector<32x32xf32> -> vector<32x32xf32>
    %c0_3 = arith.constant 0 : index
    %c0_4 = arith.constant 0 : index
    %3 = vector.load %arg3[%c0_3, %c0_4] : memref<1x32xf32, #tpu.memory_space<vmem>>, vector<1x32xf32>
    %4 = vector.broadcast %3 : vector<1x32xf32> to vector<32x32xf32>
    %5 = arith.addf %2, %4 : vector<32x32xf32>
    %c0_5 = arith.constant 0 : index
    %c0_6 = arith.constant 0 : index
    %6 = vector.load %arg4[%c0_5, %c0_6] : memref<32x32xf32, #tpu.memory_space<vmem>>, vector<32x32xf32>
    %7 = arith.addf %5, %6 : vector<32x32xf32>
    %c0_7 = arith.constant 0 : index
    %c0_8 = arith.constant 0 : index
    %8 = vector.load %arg5[%c0_7, %c0_8] : memref<32x32xf32, #tpu.memory_space<vmem>>, vector<32x32xf32>
    %9 = arith.mulf %7, %7 : vector<32x32xf32>
    %cst_9 = arith.constant dense<0.000000e+00> : vector<32xf32>
    %10 = vector.multi_reduction <add>, %9, %cst_9 [1] : vector<32x32xf32> to vector<32xf32>
    %11 = vector.shape_cast %10 : vector<32xf32> to vector<32x1xf32>
    %cst_10 = arith.constant 3.200000e+01 : f32
    %12 = vector.broadcast %cst_10 : f32 to vector<32x1xf32>
    %13 = arith.divf %11, %12 : vector<32x1xf32>
    %14 = math.rsqrt %13 : vector<32x1xf32>
    %15 = vector.broadcast %14 : vector<32x1xf32> to vector<32x32xf32>
    %16 = arith.mulf %7, %15 : vector<32x32xf32>
    %c0_11 = arith.constant 0 : index
    %c0_12 = arith.constant 0 : index
    %c0_13 = arith.constant 0 : index
    %17 = vector.load %arg6[%c0_11, %c0_12, %c0_13] : memref<4x32x32xf32, #tpu.memory_space<vmem>>, vector<1x32x32xf32>
    %18 = vector.shape_cast %17 : vector<1x32x32xf32> to vector<32x32xf32>
    %cst_14 = arith.constant dense<0.000000e+00> : vector<32x32xf32>
    %19 = tpu.matmul %16, %18, %cst_14 {dimension_numbers = #tpu.dot_dimension_numbers<[1], [0], [0], [1], [0, 0, 1, 1], [], []>} : vector<32x32xf32>, vector<32x32xf32>, vector<32x32xf32> -> vector<32x32xf32>
    %cst_15 = arith.constant 2.500000e-01 : f32
    %20 = vector.broadcast %cst_15 : f32 to vector<32x32xf32>
    %21 = arith.mulf %19, %20 : vector<32x32xf32>
    %cst_16 = arith.constant dense<0xFF800000> : vector<32xf32>
    %22 = vector.multi_reduction <maximumf>, %21, %cst_16 [1] : vector<32x32xf32> to vector<32xf32>
    %23 = vector.shape_cast %22 : vector<32xf32> to vector<32x1xf32>
    %24 = vector.broadcast %23 : vector<32x1xf32> to vector<32x32xf32>
    %25 = arith.subf %21, %24 : vector<32x32xf32>
    %26 = math.exp %25 : vector<32x32xf32>
    %cst_17 = arith.constant dense<0.000000e+00> : vector<32x32xf32>
    %27 = tpu.matmul %26, %8, %cst_17 {dimension_numbers = #tpu.dot_dimension_numbers<[1], [0], [0], [1], [0, 0, 1, 1], [], []>} : vector<32x32xf32>, vector<32x32xf32>, vector<32x32xf32> -> vector<32x32xf32>
    %28 = tpu.reciprocal %27 {approx = true} : vector<32x32xf32> -> vector<32x32xf32>
    %29 = arith.mulf %26, %28 : vector<32x32xf32>
    %c0_18 = arith.constant 0 : index
    %c0_19 = arith.constant 0 : index
    %c0_20 = arith.constant 0 : index
    %30 = vector.load %arg7[%c0_18, %c0_19, %c0_20] : memref<4x32x32xf32, #tpu.memory_space<vmem>>, vector<1x32x32xf32>
    %31 = vector.shape_cast %30 : vector<1x32x32xf32> to vector<32x32xf32>
    %cst_21 = arith.constant dense<0.000000e+00> : vector<32x32xf32>
    %32 = tpu.matmul %29, %31, %cst_21 {dimension_numbers = #tpu.dot_dimension_numbers<[1], [0], [0], [1], [0, 0, 1, 1], [], []>} : vector<32x32xf32>, vector<32x32xf32>, vector<32x32xf32> -> vector<32x32xf32>
    %33 = arith.addf %7, %32 : vector<32x32xf32>
    %34 = arith.mulf %33, %33 : vector<32x32xf32>
    %cst_22 = arith.constant dense<0.000000e+00> : vector<32xf32>
    %35 = vector.multi_reduction <add>, %34, %cst_22 [1] : vector<32x32xf32> to vector<32xf32>
    %36 = vector.shape_cast %35 : vector<32xf32> to vector<32x1xf32>
    %cst_23 = arith.constant 3.200000e+01 : f32
    %37 = vector.broadcast %cst_23 : f32 to vector<32x1xf32>
    %38 = arith.divf %36, %37 : vector<32x1xf32>
    %39 = math.rsqrt %38 : vector<32x1xf32>
    %40 = vector.broadcast %39 : vector<32x1xf32> to vector<32x32xf32>
    %41 = arith.mulf %33, %40 : vector<32x32xf32>
    %c0_24 = arith.constant 0 : index
    %c0_25 = arith.constant 0 : index
    %c0_26 = arith.constant 0 : index
    %42 = vector.load %arg8[%c0_24, %c0_25, %c0_26] : memref<4x32x96xf32, #tpu.memory_space<vmem>>, vector<1x32x96xf32>
    %43 = vector.shape_cast %42 : vector<1x32x96xf32> to vector<32x96xf32>
    %cst_27 = arith.constant dense<0.000000e+00> : vector<32x96xf32>
    %44 = tpu.matmul %41, %43, %cst_27 {dimension_numbers = #tpu.dot_dimension_numbers<[1], [0], [0], [1], [0, 0, 1, 1], [], []>} : vector<32x32xf32>, vector<32x96xf32>, vector<32x96xf32> -> vector<32x96xf32>
    %c0_28 = arith.constant 0 : index
    %c0_29 = arith.constant 0 : index
    %c0_30 = arith.constant 0 : index
    %45 = vector.load %arg9[%c0_28, %c0_29, %c0_30] : memref<4x1x96xf32, #tpu.memory_space<vmem>>, vector<1x1x96xf32>
    %46 = vector.shape_cast %45 : vector<1x1x96xf32> to vector<1x96xf32>
    %47 = vector.broadcast %46 : vector<1x96xf32> to vector<32x96xf32>
    %48 = arith.addf %44, %47 : vector<32x96xf32>
    %cst_31 = arith.constant 5.000000e-01 : f32
    %49 = vector.broadcast %cst_31 : f32 to vector<32x96xf32>
    %50 = arith.mulf %49, %48 : vector<32x96xf32>
    %51 = math.tanh %50 : vector<32x96xf32>
    %cst_32 = arith.constant 1.000000e+00 : f32
    %52 = vector.broadcast %cst_32 : f32 to vector<32x96xf32>
    %53 = arith.addf %51, %52 : vector<32x96xf32>
    %cst_33 = arith.constant 5.000000e-01 : f32
    %54 = vector.broadcast %cst_33 : f32 to vector<32x96xf32>
    %55 = arith.mulf %54, %53 : vector<32x96xf32>
    %56 = arith.mulf %48, %55 : vector<32x96xf32>
    %c0_34 = arith.constant 0 : index
    %c0_35 = arith.constant 0 : index
    %c0_36 = arith.constant 0 : index
    %57 = vector.load %arg10[%c0_34, %c0_35, %c0_36] : memref<4x96x32xf32, #tpu.memory_space<vmem>>, vector<1x96x32xf32>
    %58 = vector.shape_cast %57 : vector<1x96x32xf32> to vector<96x32xf32>
    %cst_37 = arith.constant dense<0.000000e+00> : vector<32x32xf32>
    %59 = tpu.matmul %56, %58, %cst_37 {dimension_numbers = #tpu.dot_dimension_numbers<[1], [0], [0], [1], [0, 0, 1, 1], [], []>} : vector<32x96xf32>, vector<96x32xf32>, vector<32x32xf32> -> vector<32x32xf32>
    %c0_38 = arith.constant 0 : index
    %c0_39 = arith.constant 0 : index
    %c0_40 = arith.constant 0 : index
    %60 = vector.load %arg11[%c0_38, %c0_39, %c0_40] : memref<4x1x32xf32, #tpu.memory_space<vmem>>, vector<1x1x32xf32>
    %61 = vector.shape_cast %60 : vector<1x1x32xf32> to vector<1x32xf32>
    %62 = vector.broadcast %61 : vector<1x32xf32> to vector<32x32xf32>
    %63 = arith.addf %59, %62 : vector<32x32xf32>
    %cst_41 = arith.constant 5.000000e-01 : f32
    %64 = vector.broadcast %cst_41 : f32 to vector<32x32xf32>
    %65 = arith.mulf %64, %63 : vector<32x32xf32>
    %66 = math.tanh %65 : vector<32x32xf32>
    %cst_42 = arith.constant 1.000000e+00 : f32
    %67 = vector.broadcast %cst_42 : f32 to vector<32x32xf32>
    %68 = arith.addf %66, %67 : vector<32x32xf32>
    %cst_43 = arith.constant 5.000000e-01 : f32
    %69 = vector.broadcast %cst_43 : f32 to vector<32x32xf32>
    %70 = arith.mulf %69, %68 : vector<32x32xf32>
    %71 = arith.mulf %63, %70 : vector<32x32xf32>
    %72 = arith.addf %33, %71 : vector<32x32xf32>
    %73 = arith.mulf %72, %72 : vector<32x32xf32>
    %cst_44 = arith.constant dense<0.000000e+00> : vector<32xf32>
    %74 = vector.multi_reduction <add>, %73, %cst_44 [1] : vector<32x32xf32> to vector<32xf32>
    %75 = vector.shape_cast %74 : vector<32xf32> to vector<32x1xf32>
    %cst_45 = arith.constant 3.200000e+01 : f32
    %76 = vector.broadcast %cst_45 : f32 to vector<32x1xf32>
    %77 = arith.divf %75, %76 : vector<32x1xf32>
    %78 = math.rsqrt %77 : vector<32x1xf32>
    %79 = vector.broadcast %78 : vector<32x1xf32> to vector<32x32xf32>
    %80 = arith.mulf %72, %79 : vector<32x32xf32>
    %c1 = arith.constant 1 : index
    %c0_46 = arith.constant 0 : index
    %c0_47 = arith.constant 0 : index
    %81 = vector.load %arg6[%c1, %c0_46, %c0_47] : memref<4x32x32xf32, #tpu.memory_space<vmem>>, vector<1x32x32xf32>
    %82 = vector.shape_cast %81 : vector<1x32x32xf32> to vector<32x32xf32>
    %cst_48 = arith.constant dense<0.000000e+00> : vector<32x32xf32>
    %83 = tpu.matmul %80, %82, %cst_48 {dimension_numbers = #tpu.dot_dimension_numbers<[1], [0], [0], [1], [0, 0, 1, 1], [], []>} : vector<32x32xf32>, vector<32x32xf32>, vector<32x32xf32> -> vector<32x32xf32>
    %cst_49 = arith.constant 2.500000e-01 : f32
    %84 = vector.broadcast %cst_49 : f32 to vector<32x32xf32>
    %85 = arith.mulf %83, %84 : vector<32x32xf32>
    %cst_50 = arith.constant dense<0xFF800000> : vector<32xf32>
    %86 = vector.multi_reduction <maximumf>, %85, %cst_50 [1] : vector<32x32xf32> to vector<32xf32>
    %87 = vector.shape_cast %86 : vector<32xf32> to vector<32x1xf32>
    %88 = vector.broadcast %87 : vector<32x1xf32> to vector<32x32xf32>
    %89 = arith.subf %85, %88 : vector<32x32xf32>
    %90 = math.exp %89 : vector<32x32xf32>
    %cst_51 = arith.constant dense<0.000000e+00> : vector<32x32xf32>
    %91 = tpu.matmul %90, %8, %cst_51 {dimension_numbers = #tpu.dot_dimension_numbers<[1], [0], [0], [1], [0, 0, 1, 1], [], []>} : vector<32x32xf32>, vector<32x32xf32>, vector<32x32xf32> -> vector<32x32xf32>
    %92 = tpu.reciprocal %91 {approx = true} : vector<32x32xf32> -> vector<32x32xf32>
    %93 = arith.mulf %90, %92 : vector<32x32xf32>
    %c1_52 = arith.constant 1 : index
    %c0_53 = arith.constant 0 : index
    %c0_54 = arith.constant 0 : index
    %94 = vector.load %arg7[%c1_52, %c0_53, %c0_54] : memref<4x32x32xf32, #tpu.memory_space<vmem>>, vector<1x32x32xf32>
    %95 = vector.shape_cast %94 : vector<1x32x32xf32> to vector<32x32xf32>
    %cst_55 = arith.constant dense<0.000000e+00> : vector<32x32xf32>
    %96 = tpu.matmul %93, %95, %cst_55 {dimension_numbers = #tpu.dot_dimension_numbers<[1], [0], [0], [1], [0, 0, 1, 1], [], []>} : vector<32x32xf32>, vector<32x32xf32>, vector<32x32xf32> -> vector<32x32xf32>
    %97 = arith.addf %72, %96 : vector<32x32xf32>
    %98 = arith.mulf %97, %97 : vector<32x32xf32>
    %cst_56 = arith.constant dense<0.000000e+00> : vector<32xf32>
    %99 = vector.multi_reduction <add>, %98, %cst_56 [1] : vector<32x32xf32> to vector<32xf32>
    %100 = vector.shape_cast %99 : vector<32xf32> to vector<32x1xf32>
    %cst_57 = arith.constant 3.200000e+01 : f32
    %101 = vector.broadcast %cst_57 : f32 to vector<32x1xf32>
    %102 = arith.divf %100, %101 : vector<32x1xf32>
    %103 = math.rsqrt %102 : vector<32x1xf32>
    %104 = vector.broadcast %103 : vector<32x1xf32> to vector<32x32xf32>
    %105 = arith.mulf %97, %104 : vector<32x32xf32>
    %c1_58 = arith.constant 1 : index
    %c0_59 = arith.constant 0 : index
    %c0_60 = arith.constant 0 : index
    %106 = vector.load %arg8[%c1_58, %c0_59, %c0_60] : memref<4x32x96xf32, #tpu.memory_space<vmem>>, vector<1x32x96xf32>
    %107 = vector.shape_cast %106 : vector<1x32x96xf32> to vector<32x96xf32>
    %cst_61 = arith.constant dense<0.000000e+00> : vector<32x96xf32>
    %108 = tpu.matmul %105, %107, %cst_61 {dimension_numbers = #tpu.dot_dimension_numbers<[1], [0], [0], [1], [0, 0, 1, 1], [], []>} : vector<32x32xf32>, vector<32x96xf32>, vector<32x96xf32> -> vector<32x96xf32>
    %c1_62 = arith.constant 1 : index
    %c0_63 = arith.constant 0 : index
    %c0_64 = arith.constant 0 : index
    %109 = vector.load %arg9[%c1_62, %c0_63, %c0_64] : memref<4x1x96xf32, #tpu.memory_space<vmem>>, vector<1x1x96xf32>
    %110 = vector.shape_cast %109 : vector<1x1x96xf32> to vector<1x96xf32>
    %111 = vector.broadcast %110 : vector<1x96xf32> to vector<32x96xf32>
    %112 = arith.addf %108, %111 : vector<32x96xf32>
    %cst_65 = arith.constant 5.000000e-01 : f32
    %113 = vector.broadcast %cst_65 : f32 to vector<32x96xf32>
    %114 = arith.mulf %113, %112 : vector<32x96xf32>
    %115 = math.tanh %114 : vector<32x96xf32>
    %cst_66 = arith.constant 1.000000e+00 : f32
    %116 = vector.broadcast %cst_66 : f32 to vector<32x96xf32>
    %117 = arith.addf %115, %116 : vector<32x96xf32>
    %cst_67 = arith.constant 5.000000e-01 : f32
    %118 = vector.broadcast %cst_67 : f32 to vector<32x96xf32>
    %119 = arith.mulf %118, %117 : vector<32x96xf32>
    %120 = arith.mulf %112, %119 : vector<32x96xf32>
    %c1_68 = arith.constant 1 : index
    %c0_69 = arith.constant 0 : index
    %c0_70 = arith.constant 0 : index
    %121 = vector.load %arg10[%c1_68, %c0_69, %c0_70] : memref<4x96x32xf32, #tpu.memory_space<vmem>>, vector<1x96x32xf32>
    %122 = vector.shape_cast %121 : vector<1x96x32xf32> to vector<96x32xf32>
    %cst_71 = arith.constant dense<0.000000e+00> : vector<32x32xf32>
    %123 = tpu.matmul %120, %122, %cst_71 {dimension_numbers = #tpu.dot_dimension_numbers<[1], [0], [0], [1], [0, 0, 1, 1], [], []>} : vector<32x96xf32>, vector<96x32xf32>, vector<32x32xf32> -> vector<32x32xf32>
    %c1_72 = arith.constant 1 : index
    %c0_73 = arith.constant 0 : index
    %c0_74 = arith.constant 0 : index
    %124 = vector.load %arg11[%c1_72, %c0_73, %c0_74] : memref<4x1x32xf32, #tpu.memory_space<vmem>>, vector<1x1x32xf32>
    %125 = vector.shape_cast %124 : vector<1x1x32xf32> to vector<1x32xf32>
    %126 = vector.broadcast %125 : vector<1x32xf32> to vector<32x32xf32>
    %127 = arith.addf %123, %126 : vector<32x32xf32>
    %cst_75 = arith.constant 5.000000e-01 : f32
    %128 = vector.broadcast %cst_75 : f32 to vector<32x32xf32>
    %129 = arith.mulf %128, %127 : vector<32x32xf32>
    %130 = math.tanh %129 : vector<32x32xf32>
    %cst_76 = arith.constant 1.000000e+00 : f32
    %131 = vector.broadcast %cst_76 : f32 to vector<32x32xf32>
    %132 = arith.addf %130, %131 : vector<32x32xf32>
    %cst_77 = arith.constant 5.000000e-01 : f32
    %133 = vector.broadcast %cst_77 : f32 to vector<32x32xf32>
    %134 = arith.mulf %133, %132 : vector<32x32xf32>
    %135 = arith.mulf %127, %134 : vector<32x32xf32>
    %136 = arith.addf %97, %135 : vector<32x32xf32>
    %c0_78 = arith.constant 0 : index
    %c0_79 = arith.constant 0 : index
    %137 = vector.load %arg14[%c0_78, %c0_79] : memref<32x32xf32, #tpu.memory_space<vmem>>, vector<32x32xf32>
    tpu.vector_store %arg14[%c0_78, %c0_79], %136 {strides = array<i32>} : memref<32x32xf32, #tpu.memory_space<vmem>>, vector<32x32xf32>,
    %138 = arith.mulf %136, %136 : vector<32x32xf32>
    %cst_80 = arith.constant dense<0.000000e+00> : vector<32xf32>
    %139 = vector.multi_reduction <add>, %138, %cst_80 [1] : vector<32x32xf32> to vector<32xf32>
    %140 = vector.shape_cast %139 : vector<32xf32> to vector<32x1xf32>
    %cst_81 = arith.constant 3.200000e+01 : f32
    %141 = vector.broadcast %cst_81 : f32 to vector<32x1xf32>
    %142 = arith.divf %140, %141 : vector<32x1xf32>
    %143 = math.rsqrt %142 : vector<32x1xf32>
    %144 = vector.broadcast %143 : vector<32x1xf32> to vector<32x32xf32>
    %145 = arith.mulf %136, %144 : vector<32x32xf32>
    %c2 = arith.constant 2 : index
    %c0_82 = arith.constant 0 : index
    %c0_83 = arith.constant 0 : index
    %146 = vector.load %arg6[%c2, %c0_82, %c0_83] : memref<4x32x32xf32, #tpu.memory_space<vmem>>, vector<1x32x32xf32>
    %147 = vector.shape_cast %146 : vector<1x32x32xf32> to vector<32x32xf32>
    %cst_84 = arith.constant dense<0.000000e+00> : vector<32x32xf32>
    %148 = tpu.matmul %145, %147, %cst_84 {dimension_numbers = #tpu.dot_dimension_numbers<[1], [0], [0], [1], [0, 0, 1, 1], [], []>} : vector<32x32xf32>, vector<32x32xf32>, vector<32x32xf32> -> vector<32x32xf32>
    %cst_85 = arith.constant 2.500000e-01 : f32
    %149 = vector.broadcast %cst_85 : f32 to vector<32x32xf32>
    %150 = arith.mulf %148, %149 : vector<32x32xf32>
    %cst_86 = arith.constant dense<0xFF800000> : vector<32xf32>
    %151 = vector.multi_reduction <maximumf>, %150, %cst_86 [1] : vector<32x32xf32> to vector<32xf32>
    %152 = vector.shape_cast %151 : vector<32xf32> to vector<32x1xf32>
    %153 = vector.broadcast %152 : vector<32x1xf32> to vector<32x32xf32>
    %154 = arith.subf %150, %153 : vector<32x32xf32>
    %155 = math.exp %154 : vector<32x32xf32>
    %cst_87 = arith.constant dense<0.000000e+00> : vector<32x32xf32>
    %156 = tpu.matmul %155, %8, %cst_87 {dimension_numbers = #tpu.dot_dimension_numbers<[1], [0], [0], [1], [0, 0, 1, 1], [], []>} : vector<32x32xf32>, vector<32x32xf32>, vector<32x32xf32> -> vector<32x32xf32>
    %157 = tpu.reciprocal %156 {approx = true} : vector<32x32xf32> -> vector<32x32xf32>
    %158 = arith.mulf %155, %157 : vector<32x32xf32>
    %c2_88 = arith.constant 2 : index
    %c0_89 = arith.constant 0 : index
    %c0_90 = arith.constant 0 : index
    %159 = vector.load %arg7[%c2_88, %c0_89, %c0_90] : memref<4x32x32xf32, #tpu.memory_space<vmem>>, vector<1x32x32xf32>
    %160 = vector.shape_cast %159 : vector<1x32x32xf32> to vector<32x32xf32>
    %cst_91 = arith.constant dense<0.000000e+00> : vector<32x32xf32>
    %161 = tpu.matmul %158, %160, %cst_91 {dimension_numbers = #tpu.dot_dimension_numbers<[1], [0], [0], [1], [0, 0, 1, 1], [], []>} : vector<32x32xf32>, vector<32x32xf32>, vector<32x32xf32> -> vector<32x32xf32>
    %162 = arith.addf %136, %161 : vector<32x32xf32>
    %163 = arith.mulf %162, %162 : vector<32x32xf32>
    %cst_92 = arith.constant dense<0.000000e+00> : vector<32xf32>
    %164 = vector.multi_reduction <add>, %163, %cst_92 [1] : vector<32x32xf32> to vector<32xf32>
    %165 = vector.shape_cast %164 : vector<32xf32> to vector<32x1xf32>
    %cst_93 = arith.constant 3.200000e+01 : f32
    %166 = vector.broadcast %cst_93 : f32 to vector<32x1xf32>
    %167 = arith.divf %165, %166 : vector<32x1xf32>
    %168 = math.rsqrt %167 : vector<32x1xf32>
    %169 = vector.broadcast %168 : vector<32x1xf32> to vector<32x32xf32>
    %170 = arith.mulf %162, %169 : vector<32x32xf32>
    %c2_94 = arith.constant 2 : index
    %c0_95 = arith.constant 0 : index
    %c0_96 = arith.constant 0 : index
    %171 = vector.load %arg8[%c2_94, %c0_95, %c0_96] : memref<4x32x96xf32, #tpu.memory_space<vmem>>, vector<1x32x96xf32>
    %172 = vector.shape_cast %171 : vector<1x32x96xf32> to vector<32x96xf32>
    %cst_97 = arith.constant dense<0.000000e+00> : vector<32x96xf32>
    %173 = tpu.matmul %170, %172, %cst_97 {dimension_numbers = #tpu.dot_dimension_numbers<[1], [0], [0], [1], [0, 0, 1, 1], [], []>} : vector<32x32xf32>, vector<32x96xf32>, vector<32x96xf32> -> vector<32x96xf32>
    %c2_98 = arith.constant 2 : index
    %c0_99 = arith.constant 0 : index
    %c0_100 = arith.constant 0 : index
    %174 = vector.load %arg9[%c2_98, %c0_99, %c0_100] : memref<4x1x96xf32, #tpu.memory_space<vmem>>, vector<1x1x96xf32>
    %175 = vector.shape_cast %174 : vector<1x1x96xf32> to vector<1x96xf32>
    %176 = vector.broadcast %175 : vector<1x96xf32> to vector<32x96xf32>
    %177 = arith.addf %173, %176 : vector<32x96xf32>
    %cst_101 = arith.constant 5.000000e-01 : f32
    %178 = vector.broadcast %cst_101 : f32 to vector<32x96xf32>
    %179 = arith.mulf %178, %177 : vector<32x96xf32>
    %180 = math.tanh %179 : vector<32x96xf32>
    %cst_102 = arith.constant 1.000000e+00 : f32
    %181 = vector.broadcast %cst_102 : f32 to vector<32x96xf32>
    %182 = arith.addf %180, %181 : vector<32x96xf32>
    %cst_103 = arith.constant 5.000000e-01 : f32
    %183 = vector.broadcast %cst_103 : f32 to vector<32x96xf32>
    %184 = arith.mulf %183, %182 : vector<32x96xf32>
    %185 = arith.mulf %177, %184 : vector<32x96xf32>
    %c2_104 = arith.constant 2 : index
    %c0_105 = arith.constant 0 : index
    %c0_106 = arith.constant 0 : index
    %186 = vector.load %arg10[%c2_104, %c0_105, %c0_106] : memref<4x96x32xf32, #tpu.memory_space<vmem>>, vector<1x96x32xf32>
    %187 = vector.shape_cast %186 : vector<1x96x32xf32> to vector<96x32xf32>
    %cst_107 = arith.constant dense<0.000000e+00> : vector<32x32xf32>
    %188 = tpu.matmul %185, %187, %cst_107 {dimension_numbers = #tpu.dot_dimension_numbers<[1], [0], [0], [1], [0, 0, 1, 1], [], []>} : vector<32x96xf32>, vector<96x32xf32>, vector<32x32xf32> -> vector<32x32xf32>
    %c2_108 = arith.constant 2 : index
    %c0_109 = arith.constant 0 : index
    %c0_110 = arith.constant 0 : index
    %189 = vector.load %arg11[%c2_108, %c0_109, %c0_110] : memref<4x1x32xf32, #tpu.memory_space<vmem>>, vector<1x1x32xf32>
    %190 = vector.shape_cast %189 : vector<1x1x32xf32> to vector<1x32xf32>
    %191 = vector.broadcast %190 : vector<1x32xf32> to vector<32x32xf32>
    %192 = arith.addf %188, %191 : vector<32x32xf32>
    %cst_111 = arith.constant 5.000000e-01 : f32
    %193 = vector.broadcast %cst_111 : f32 to vector<32x32xf32>
    %194 = arith.mulf %193, %192 : vector<32x32xf32>
    %195 = math.tanh %194 : vector<32x32xf32>
    %cst_112 = arith.constant 1.000000e+00 : f32
    %196 = vector.broadcast %cst_112 : f32 to vector<32x32xf32>
    %197 = arith.addf %195, %196 : vector<32x32xf32>
    %cst_113 = arith.constant 5.000000e-01 : f32
    %198 = vector.broadcast %cst_113 : f32 to vector<32x32xf32>
    %199 = arith.mulf %198, %197 : vector<32x32xf32>
    %200 = arith.mulf %192, %199 : vector<32x32xf32>
    %201 = arith.addf %162, %200 : vector<32x32xf32>
    %202 = arith.mulf %201, %201 : vector<32x32xf32>
    %cst_114 = arith.constant dense<0.000000e+00> : vector<32xf32>
    %203 = vector.multi_reduction <add>, %202, %cst_114 [1] : vector<32x32xf32> to vector<32xf32>
    %204 = vector.shape_cast %203 : vector<32xf32> to vector<32x1xf32>
    %cst_115 = arith.constant 3.200000e+01 : f32
    %205 = vector.broadcast %cst_115 : f32 to vector<32x1xf32>
    %206 = arith.divf %204, %205 : vector<32x1xf32>
    %207 = math.rsqrt %206 : vector<32x1xf32>
    %208 = vector.broadcast %207 : vector<32x1xf32> to vector<32x32xf32>
    %209 = arith.mulf %201, %208 : vector<32x32xf32>
    %c3 = arith.constant 3 : index
    %c0_116 = arith.constant 0 : index
    %c0_117 = arith.constant 0 : index
    %210 = vector.load %arg6[%c3, %c0_116, %c0_117] : memref<4x32x32xf32, #tpu.memory_space<vmem>>, vector<1x32x32xf32>
    %211 = vector.shape_cast %210 : vector<1x32x32xf32> to vector<32x32xf32>
    %cst_118 = arith.constant dense<0.000000e+00> : vector<32x32xf32>
    %212 = tpu.matmul %209, %211, %cst_118 {dimension_numbers = #tpu.dot_dimension_numbers<[1], [0], [0], [1], [0, 0, 1, 1], [], []>} : vector<32x32xf32>, vector<32x32xf32>, vector<32x32xf32> -> vector<32x32xf32>
    %cst_119 = arith.constant 2.500000e-01 : f32
    %213 = vector.broadcast %cst_119 : f32 to vector<32x32xf32>
    %214 = arith.mulf %212, %213 : vector<32x32xf32>
    %cst_120 = arith.constant dense<0xFF800000> : vector<32xf32>
    %215 = vector.multi_reduction <maximumf>, %214, %cst_120 [1] : vector<32x32xf32> to vector<32xf32>
    %216 = vector.shape_cast %215 : vector<32xf32> to vector<32x1xf32>
    %217 = vector.broadcast %216 : vector<32x1xf32> to vector<32x32xf32>
    %218 = arith.subf %214, %217 : vector<32x32xf32>
    %219 = math.exp %218 : vector<32x32xf32>
    %cst_121 = arith.constant dense<0.000000e+00> : vector<32x32xf32>
    %220 = tpu.matmul %219, %8, %cst_121 {dimension_numbers = #tpu.dot_dimension_numbers<[1], [0], [0], [1], [0, 0, 1, 1], [], []>} : vector<32x32xf32>, vector<32x32xf32>, vector<32x32xf32> -> vector<32x32xf32>
    %221 = tpu.reciprocal %220 {approx = true} : vector<32x32xf32> -> vector<32x32xf32>
    %222 = arith.mulf %219, %221 : vector<32x32xf32>
    %c3_122 = arith.constant 3 : index
    %c0_123 = arith.constant 0 : index
    %c0_124 = arith.constant 0 : index
    %223 = vector.load %arg7[%c3_122, %c0_123, %c0_124] : memref<4x32x32xf32, #tpu.memory_space<vmem>>, vector<1x32x32xf32>
    %224 = vector.shape_cast %223 : vector<1x32x32xf32> to vector<32x32xf32>
    %cst_125 = arith.constant dense<0.000000e+00> : vector<32x32xf32>
    %225 = tpu.matmul %222, %224, %cst_125 {dimension_numbers = #tpu.dot_dimension_numbers<[1], [0], [0], [1], [0, 0, 1, 1], [], []>} : vector<32x32xf32>, vector<32x32xf32>, vector<32x32xf32> -> vector<32x32xf32>
    %226 = arith.addf %201, %225 : vector<32x32xf32>
    %227 = arith.mulf %226, %226 : vector<32x32xf32>
    %cst_126 = arith.constant dense<0.000000e+00> : vector<32xf32>
    %228 = vector.multi_reduction <add>, %227, %cst_126 [1] : vector<32x32xf32> to vector<32xf32>
    %229 = vector.shape_cast %228 : vector<32xf32> to vector<32x1xf32>
    %cst_127 = arith.constant 3.200000e+01 : f32
    %230 = vector.broadcast %cst_127 : f32 to vector<32x1xf32>
    %231 = arith.divf %229, %230 : vector<32x1xf32>
    %232 = math.rsqrt %231 : vector<32x1xf32>
    %233 = vector.broadcast %232 : vector<32x1xf32> to vector<32x32xf32>
    %234 = arith.mulf %226, %233 : vector<32x32xf32>
    %c3_128 = arith.constant 3 : index
    %c0_129 = arith.constant 0 : index
    %c0_130 = arith.constant 0 : index
    %235 = vector.load %arg8[%c3_128, %c0_129, %c0_130] : memref<4x32x96xf32, #tpu.memory_space<vmem>>, vector<1x32x96xf32>
    %236 = vector.shape_cast %235 : vector<1x32x96xf32> to vector<32x96xf32>
    %cst_131 = arith.constant dense<0.000000e+00> : vector<32x96xf32>
    %237 = tpu.matmul %234, %236, %cst_131 {dimension_numbers = #tpu.dot_dimension_numbers<[1], [0], [0], [1], [0, 0, 1, 1], [], []>} : vector<32x32xf32>, vector<32x96xf32>, vector<32x96xf32> -> vector<32x96xf32>
    %c3_132 = arith.constant 3 : index
    %c0_133 = arith.constant 0 : index
    %c0_134 = arith.constant 0 : index
    %238 = vector.load %arg9[%c3_132, %c0_133, %c0_134] : memref<4x1x96xf32, #tpu.memory_space<vmem>>, vector<1x1x96xf32>
    %239 = vector.shape_cast %238 : vector<1x1x96xf32> to vector<1x96xf32>
    %240 = vector.broadcast %239 : vector<1x96xf32> to vector<32x96xf32>
    %241 = arith.addf %237, %240 : vector<32x96xf32>
    %cst_135 = arith.constant 5.000000e-01 : f32
    %242 = vector.broadcast %cst_135 : f32 to vector<32x96xf32>
    %243 = arith.mulf %242, %241 : vector<32x96xf32>
    %244 = math.tanh %243 : vector<32x96xf32>
    %cst_136 = arith.constant 1.000000e+00 : f32
    %245 = vector.broadcast %cst_136 : f32 to vector<32x96xf32>
    %246 = arith.addf %244, %245 : vector<32x96xf32>
    %cst_137 = arith.constant 5.000000e-01 : f32
    %247 = vector.broadcast %cst_137 : f32 to vector<32x96xf32>
    %248 = arith.mulf %247, %246 : vector<32x96xf32>
    %249 = arith.mulf %241, %248 : vector<32x96xf32>
    %c3_138 = arith.constant 3 : index
    %c0_139 = arith.constant 0 : index
    %c0_140 = arith.constant 0 : index
    %250 = vector.load %arg10[%c3_138, %c0_139, %c0_140] : memref<4x96x32xf32, #tpu.memory_space<vmem>>, vector<1x96x32xf32>
    %251 = vector.shape_cast %250 : vector<1x96x32xf32> to vector<96x32xf32>
    %cst_141 = arith.constant dense<0.000000e+00> : vector<32x32xf32>
    %252 = tpu.matmul %249, %251, %cst_141 {dimension_numbers = #tpu.dot_dimension_numbers<[1], [0], [0], [1], [0, 0, 1, 1], [], []>} : vector<32x96xf32>, vector<96x32xf32>, vector<32x32xf32> -> vector<32x32xf32>
    %c3_142 = arith.constant 3 : index
    %c0_143 = arith.constant 0 : index
    %c0_144 = arith.constant 0 : index
    %253 = vector.load %arg11[%c3_142, %c0_143, %c0_144] : memref<4x1x32xf32, #tpu.memory_space<vmem>>, vector<1x1x32xf32>
    %254 = vector.shape_cast %253 : vector<1x1x32xf32> to vector<1x32xf32>
    %255 = vector.broadcast %254 : vector<1x32xf32> to vector<32x32xf32>
    %256 = arith.addf %252, %255 : vector<32x32xf32>
    %cst_145 = arith.constant 5.000000e-01 : f32
    %257 = vector.broadcast %cst_145 : f32 to vector<32x32xf32>
    %258 = arith.mulf %257, %256 : vector<32x32xf32>
    %259 = math.tanh %258 : vector<32x32xf32>
    %cst_146 = arith.constant 1.000000e+00 : f32
    %260 = vector.broadcast %cst_146 : f32 to vector<32x32xf32>
    %261 = arith.addf %259, %260 : vector<32x32xf32>
    %cst_147 = arith.constant 5.000000e-01 : f32
    %262 = vector.broadcast %cst_147 : f32 to vector<32x32xf32>
    %263 = arith.mulf %262, %261 : vector<32x32xf32>
    %264 = arith.mulf %256, %263 : vector<32x32xf32>
    %265 = arith.addf %226, %264 : vector<32x32xf32>
    %c0_148 = arith.constant 0 : index
    %c0_149 = arith.constant 0 : index
    %266 = vector.load %arg12[%c0_148, %c0_149] : memref<32x48xf32, #tpu.memory_space<vmem>>, vector<32x48xf32>
    %cst_150 = arith.constant dense<0.000000e+00> : vector<32x48xf32>
    %267 = tpu.matmul %265, %266, %cst_150 {dimension_numbers = #tpu.dot_dimension_numbers<[1], [0], [0], [1], [0, 0, 1, 1], [], []>} : vector<32x32xf32>, vector<32x48xf32>, vector<32x48xf32> -> vector<32x48xf32>
    %c0_151 = arith.constant 0 : index
    %c0_152 = arith.constant 0 : index
    %268 = vector.load %arg13[%c0_151, %c0_152] : memref<1x48xf32, #tpu.memory_space<vmem>>, vector<1x48xf32>
    %269 = vector.broadcast %268 : vector<1x48xf32> to vector<32x48xf32>
    %270 = arith.addf %267, %269 : vector<32x48xf32>
    %cst_153 = arith.constant 5.000000e-01 : f32
    %271 = vector.broadcast %cst_153 : f32 to vector<32x48xf32>
    %272 = arith.mulf %271, %270 : vector<32x48xf32>
    %273 = math.tanh %272 : vector<32x48xf32>
    %cst_154 = arith.constant 1.000000e+00 : f32
    %274 = vector.broadcast %cst_154 : f32 to vector<32x48xf32>
    %275 = arith.addf %273, %274 : vector<32x48xf32>
    %cst_155 = arith.constant 5.000000e-01 : f32
    %276 = vector.broadcast %cst_155 : f32 to vector<32x48xf32>
    %277 = arith.mulf %276, %275 : vector<32x48xf32>
    %c0_156 = arith.constant 0 : index
    %c0_157 = arith.constant 0 : index
    %278 = vector.load %arg15[%c0_156, %c0_157] : memref<32x48xf32, #tpu.memory_space<vmem>>, vector<32x48xf32>
    tpu.vector_store %arg15[%c0_156, %c0_157], %277 {strides = array<i32>} : memref<32x48xf32, #tpu.memory_space<vmem>>, vector<32x48xf32>,
    return
  }
  func.func @transform_0(%arg0: i32) -> (i32, i32) {
    %c0_i32 = arith.constant 0 : i32
    %c0_i32_0 = arith.constant 0 : i32
    return %arg0, %c0_i32 : i32, i32
  }
  func.func @transform_1(%arg0: i32) -> (i32, i32) {
    %c0_i32 = arith.constant 0 : i32
    %c0_i32_0 = arith.constant 0 : i32
    %c0_i32_1 = arith.constant 0 : i32
    return %c0_i32, %c0_i32_0 : i32, i32
  }
  func.func @transform_2(%arg0: i32) -> (i32, i32) {
    %c0_i32 = arith.constant 0 : i32
    %c0_i32_0 = arith.constant 0 : i32
    %c0_i32_1 = arith.constant 0 : i32
    return %c0_i32, %c0_i32_0 : i32, i32
  }
  func.func @transform_3(%arg0: i32) -> (i32, i32) {
    %c0_i32 = arith.constant 0 : i32
    %c0_i32_0 = arith.constant 0 : i32
    return %arg0, %c0_i32 : i32, i32
  }
  func.func @transform_4(%arg0: i32) -> (i32, i32) {
    %c0_i32 = arith.constant 0 : i32
    %c0_i32_0 = arith.constant 0 : i32
    %c0_i32_1 = arith.constant 0 : i32
    return %c0_i32, %c0_i32_0 : i32, i32
  }
  func.func @transform_5(%arg0: i32) -> (i32, i32, i32) {
    %c0_i32 = arith.constant 0 : i32
    %c0_i32_0 = arith.constant 0 : i32
    %c0_i32_1 = arith.constant 0 : i32
    %c0_i32_2 = arith.constant 0 : i32
    return %c0_i32, %c0_i32_0, %c0_i32_1 : i32, i32, i32
  }
  func.func @transform_6(%arg0: i32) -> (i32, i32, i32) {
    %c0_i32 = arith.constant 0 : i32
    %c0_i32_0 = arith.constant 0 : i32
    %c0_i32_1 = arith.constant 0 : i32
    %c0_i32_2 = arith.constant 0 : i32
    return %c0_i32, %c0_i32_0, %c0_i32_1 : i32, i32, i32
  }
  func.func @transform_7(%arg0: i32) -> (i32, i32, i32) {
    %c0_i32 = arith.constant 0 : i32
    %c0_i32_0 = arith.constant 0 : i32
    %c0_i32_1 = arith.constant 0 : i32
    %c0_i32_2 = arith.constant 0 : i32
    return %c0_i32, %c0_i32_0, %c0_i32_1 : i32, i32, i32
  }
  func.func @transform_8(%arg0: i32) -> (i32, i32, i32) {
    %c0_i32 = arith.constant 0 : i32
    %c0_i32_0 = arith.constant 0 : i32
    %c0_i32_1 = arith.constant 0 : i32
    %c0_i32_2 = arith.constant 0 : i32
    return %c0_i32, %c0_i32_0, %c0_i32_1 : i32, i32, i32
  }
  func.func @transform_9(%arg0: i32) -> (i32, i32, i32) {
    %c0_i32 = arith.constant 0 : i32
    %c0_i32_0 = arith.constant 0 : i32
    %c0_i32_1 = arith.constant 0 : i32
    %c0_i32_2 = arith.constant 0 : i32
    return %c0_i32, %c0_i32_0, %c0_i32_1 : i32, i32, i32
  }
  func.func @transform_10(%arg0: i32) -> (i32, i32, i32) {
    %c0_i32 = arith.constant 0 : i32
    %c0_i32_0 = arith.constant 0 : i32
    %c0_i32_1 = arith.constant 0 : i32
    %c0_i32_2 = arith.constant 0 : i32
    return %c0_i32, %c0_i32_0, %c0_i32_1 : i32, i32, i32
  }
  func.func @transform_11(%arg0: i32) -> (i32, i32) {
    %c0_i32 = arith.constant 0 : i32
    %c0_i32_0 = arith.constant 0 : i32
    %c0_i32_1 = arith.constant 0 : i32
    return %c0_i32, %c0_i32_0 : i32, i32
  }
  func.func @transform_12(%arg0: i32) -> (i32, i32) {
    %c0_i32 = arith.constant 0 : i32
    %c0_i32_0 = arith.constant 0 : i32
    %c0_i32_1 = arith.constant 0 : i32
    return %c0_i32, %c0_i32_0 : i32, i32
  }
  func.func @transform_13(%arg0: i32) -> (i32, i32) {
    %c0_i32 = arith.constant 0 : i32
    %c0_i32_0 = arith.constant 0 : i32
    return %arg0, %c0_i32 : i32, i32
  }
  func.func @transform_14(%arg0: i32) -> (i32, i32) {
    %c0_i32 = arith.constant 0 : i32
    %c0_i32_0 = arith.constant 0 : i32
    return %arg0, %c0_i32 : i32, i32
  }
}

</mosaic_0001>

<llo_original>
// kernel: vlvae_forward.1
$region0: #{vlvae_forward.1}
  #allocation0 [shape = 'u32[]', space=smem, size = 0x4, offset = 0x4, fixed_abs, tag = 'smem constant byte address 0x4 - core index']
  #allocation1 [shape = 'u32[72,128]{1,0:T(1,128)}', space=vmem, size = 0x9000, scoped, tag = 'internal scratch']
  %s0 = inlined_call_operand.vmem [shape: f32[32,48], index: 0, kind: input, shape index: {}]
  %s1 = inlined_call_operand.vmem [shape: f32[48,32], index: 1, kind: input, shape index: {}]
  %s2 = inlined_call_operand.vmem [shape: f32[1,32], index: 2, kind: input, shape index: {}]
  %s3 = inlined_call_operand.vmem [shape: f32[32,32], index: 3, kind: input, shape index: {}]
  %s4 = inlined_call_operand.vmem [shape: f32[32,32], index: 4, kind: input, shape index: {}]
  %s5 = inlined_call_operand.vmem [shape: f32[4,32,32], index: 5, kind: input, shape index: {}]
  %s6 = inlined_call_operand.vmem [shape: f32[4,32,32], index: 6, kind: input, shape index: {}]
  %s7 = inlined_call_operand.vmem [shape: f32[4,32,96], index: 7, kind: input, shape index: {}]
  %s8 = inlined_call_operand.vmem [shape: f32[4,1,96], index: 8, kind: input, shape index: {}]
  %s9 = inlined_call_operand.vmem [shape: f32[4,96,32], index: 9, kind: input, shape index: {}]
  %s10 = inlined_call_operand.vmem [shape: f32[4,1,32], index: 10, kind: input, shape index: {}]
  %s11 = inlined_call_operand.vmem [shape: f32[32,48], index: 11, kind: input, shape index: {}]
  %s12 = inlined_call_operand.vmem [shape: f32[1,48], index: 12, kind: input, shape index: {}]
  %s13 = inlined_call_operand.hbm [shape: f32[32,32], index: 13, kind: output, shape index: {0}]
  %s14 = inlined_call_operand.vmem [shape: f32[32,48], index: 14, kind: output, shape index: {1}]
  %15 = xla_tuple %s13, %s14
  %s16 = sld [smem:[#allocation0]]
  $region70: #{vlvae_forward.1} parent=0
    _
  %s18 = ssub.s32 1, %s16
  %s19 = scalar_select 0, %s18, %s16
  $region1: #{vlvae_forward.1} parent=0
    #allocation2 [shape = 'u8[16384]{0}', space=vmem, size = 0x4000, scoped, tag = 'output window, operand 0, single buffered']
    #allocation3 [shape = 's32[1]{0}', space=sflag, size = 0x4, scoped, tag = 'scoped memory for vlvae_forward.1']
    %20 = vsyncpa [#allocation3], 0
    // Predicated region
    $region2: #{vlvae_forward.1} parent=1 // pred_check
      _
    $region3: #{vlvae_forward.1} parent=1 // pred_check_branch
      %22 = sbr.rel (0) target = $region5
    $region4: #{vlvae_forward.1} parent=1 // pred_region
      _
    $region5: #{vlvae_forward.1} parent=1 // pred_fallthru
      _
    // Predicated region
    $region6: #{vlvae_forward.1} parent=1 // pred_check
      _
    $region7: #{vlvae_forward.1} parent=1 // pred_check_branch
      %24 = sbr.rel (0) target = $region9
    $region8: #{vlvae_forward.1} parent=1 // pred_region
      _
    $region9: #{vlvae_forward.1} parent=1 // pred_fallthru
      _
    // Predicated region
    $region10: #{vlvae_forward.1} parent=1 // pred_check
      _
    $region11: #{vlvae_forward.1} parent=1 // pred_check_branch
      %26 = sbr.rel (0) target = $region13
    $region12: #{vlvae_forward.1} parent=1 // pred_region
      _
    $region13: #{vlvae_forward.1} parent=1 // pred_fallthru
      _
    // Predicated region
    $region14: #{vlvae_forward.1} parent=1 // pred_check
      _
    $region15: #{vlvae_forward.1} parent=1 // pred_check_branch
      %28 = sbr.rel (0) target = $region17
    $region16: #{vlvae_forward.1} parent=1 // pred_region
      _
    $region17: #{vlvae_forward.1} parent=1 // pred_fallthru
      _
    // Predicated region
    $region18: #{vlvae_forward.1} parent=1 // pred_check
      _
    $region19: #{vlvae_forward.1} parent=1 // pred_check_branch
      %30 = sbr.rel (0) target = $region21
    $region20: #{vlvae_forward.1} parent=1 // pred_region
      _
    $region21: #{vlvae_forward.1} parent=1 // pred_fallthru
      _
    // Predicated region
    $region22: #{vlvae_forward.1} parent=1 // pred_check
      _
    $region23: #{vlvae_forward.1} parent=1 // pred_check_branch
      %32 = sbr.rel (0) target = $region25
    $region24: #{vlvae_forward.1} parent=1 // pred_region
      _
    $region25: #{vlvae_forward.1} parent=1 // pred_fallthru
      _
    // Predicated region
    $region26: #{vlvae_forward.1} parent=1 // pred_check
      _
    $region27: #{vlvae_forward.1} parent=1 // pred_check_branch
      %34 = sbr.rel (0) target = $region29
    $region28: #{vlvae_forward.1} parent=1 // pred_region
      _
    $region29: #{vlvae_forward.1} parent=1 // pred_fallthru
      _
    // Predicated region
    $region30: #{vlvae_forward.1} parent=1 // pred_check
      _
    $region31: #{vlvae_forward.1} parent=1 // pred_check_branch
      %36 = sbr.rel (0) target = $region33
    $region32: #{vlvae_forward.1} parent=1 // pred_region
      _
    $region33: #{vlvae_forward.1} parent=1 // pred_fallthru
      _
    // Predicated region
    $region34: #{vlvae_forward.1} parent=1 // pred_check
      _
    $region35: #{vlvae_forward.1} parent=1 // pred_check_branch
      %38 = sbr.rel (0) target = $region37
    $region36: #{vlvae_forward.1} parent=1 // pred_region
      _
    $region37: #{vlvae_forward.1} parent=1 // pred_fallthru
      _
    // Predicated region
    $region38: #{vlvae_forward.1} parent=1 // pred_check
      _
    $region39: #{vlvae_forward.1} parent=1 // pred_check_branch
      %40 = sbr.rel (0) target = $region41
    $region40: #{vlvae_forward.1} parent=1 // pred_region
      _
    $region41: #{vlvae_forward.1} parent=1 // pred_fallthru
      _
    // Predicated region
    $region42: #{vlvae_forward.1} parent=1 // pred_check
      _
    $region43: #{vlvae_forward.1} parent=1 // pred_check_branch
      %42 = sbr.rel (0) target = $region45
    $region44: #{vlvae_forward.1} parent=1 // pred_region
      _
    $region45: #{vlvae_forward.1} parent=1 // pred_fallthru
      _
    // Predicated region
    $region46: #{vlvae_forward.1} parent=1 // pred_check
      _
    $region47: #{vlvae_forward.1} parent=1 // pred_check_branch
      %44 = sbr.rel (0) target = $region49
    $region48: #{vlvae_forward.1} parent=1 // pred_region
      _
    $region49: #{vlvae_forward.1} parent=1 // pred_fallthru
      _
    // Predicated region
    $region50: #{vlvae_forward.1} parent=1 // pred_check
      _
    $region51: #{vlvae_forward.1} parent=1 // pred_check_branch
      %46 = sbr.rel (0) target = $region53
    $region52: #{vlvae_forward.1} parent=1 // pred_region
      _
    $region53: #{vlvae_forward.1} parent=1 // pred_fallthru
      _
    %v47 = vld [vmem:[%s0] sm:$0xff]
    %v48 = vld [vmem:[%s0 + $0x8] sm:$0xff]
    %v49 = vld [vmem:[%s0 + $0x10] sm:$0xff]
    %v50 = vld [vmem:[%s0 + $0x18] sm:$0xff]
    %v51 = vld [vmem:[%s1] sm:$0xff]
    %v52 = vld [vmem:[%s1 + $0x8] sm:$0xff]
    %v53 = vld [vmem:[%s1 + $0x10] sm:$0xff]
    %v54 = vld [vmem:[%s1 + $0x18] sm:$0xff]
    %v55 = vld [vmem:[%s1 + $0x20] sm:$0xff]
    %v56 = vld [vmem:[%s1 + $0x28] sm:$0xff]
    %v57 = vld [vmem:[%s2] sm:$0x1]
    %v59 = vperm.slane %v57, 0
    %vm61 = vcmask 392192
    %v63 = vsel %vm61, %v47, 0
    %v66 = vsel %vm61, %v48, 0
    %v69 = vsel %vm61, %v49, 0
    %v72 = vsel %vm61, %v50, 0
    %74 = vmatpush.msra.mxu0 0.0
    %75 = vmatpush.msra.mxu0 0.0
    %76 = vmatpush.msra.mxu0 0.0
    %77 = vmatpush.msra.mxu0 0.0
    %78 = vmatpush.msra.mxu0 0.0
    %79 = vmatpush.msra.mxu0 0.0
    %80 = vmatpush.msra.mxu0 0.0
    %81 = vmatpush.msra.mxu0 0.0
    %82 = vmatpush.msra.mxu0 0.0
    %83 = vmatpush.msra.mxu0 0.0
    %84 = vmatpush.msra.mxu0 %v56
    %85 = vmatpush.msra.mxu0 %v55
    %86 = vmatpush.msra.mxu0 %v54
    %87 = vmatpush.msra.mxu0 %v53
    %88 = vmatpush.msra.mxu0 %v52
    %89 = vmatpush.msra.mxu0 %v51
    %90 = vmatmul.f32.gmra.mxu0 %v63
    %v91 = vpop.f32.mrf.mxu0
    %v92 = vadd.f32 %v59, %v91
    %93 = vmatmul.f32.gmra.mxu0 %v66
    %v94 = vpop.f32.mrf.mxu0
    %v95 = vadd.f32 %v59, %v94
    %96 = vmatmul.f32.gmra.mxu0 %v69
    %v97 = vpop.f32.mrf.mxu0
    %v98 = vadd.f32 %v59, %v97
    %99 = vmatmul.f32.gmra.mxu0 %v72
    %v100 = vpop.f32.mrf.mxu0
    %v101 = vadd.f32 %v59, %v100
    %102 = vdwg.mxu0
    %v103 = vld [vmem:[%s3] sm:$0xff]
    %v104 = vld [vmem:[%s3 + $0x8] sm:$0xff]
    %v105 = vld [vmem:[%s3 + $0x10] sm:$0xff]
    %v106 = vld [vmem:[%s3 + $0x18] sm:$0xff]
    %v107 = vadd.f32 %v92, %v103
    %v108 = vadd.f32 %v95, %v104
    %v109 = vadd.f32 %v98, %v105
    %v110 = vadd.f32 %v101, %v106
    %v111 = vld [vmem:[%s4] sm:$0xff]
    %v112 = vld [vmem:[%s4 + $0x8] sm:$0xff]
    %v113 = vld [vmem:[%s4 + $0x10] sm:$0xff]
    %v114 = vld [vmem:[%s4 + $0x18] sm:$0xff]
    %v115 = vmul.f32 %v107, %v107
    %v116 = vmul.f32 %v108, %v108
    %v117 = vmul.f32 %v109, %v109
    %v118 = vmul.f32 %v110, %v110
    %vm119 = vcmask 261120
    %v120 = vsel %vm119, %v115, 0.0
    %121 = vadd.xlane.f32.xlu0 %v120
    %v122 = vpop.xlane.xlu0 %121
    %v123 = vsel %vm119, %v116, 0.0
    %124 = vadd.xlane.f32.xlu0 %v123
    %v125 = vpop.xlane.xlu0 %124
    %v126 = vsel %vm119, %v117, 0.0
    %127 = vadd.xlane.f32.xlu0 %v126
    %v128 = vpop.xlane.xlu0 %127
    %v129 = vsel %vm119, %v118, 0.0
    %130 = vadd.xlane.f32.xlu0 %v129
    %v131 = vpop.xlane.xlu0 %130
    %v132 = vrcp.pop 32.0
    %v133 = vmul.f32 32.0, %v132
    %v134 = vsub.f32 1.0, %v133
    %v135 = vmul.f32 %v132, %v134
    %v136 = vadd.f32 %v132, %v135
    %vm137 = vweird.f32 %v132
    %v138 = vsel %vm137, %v132, %v136
    %v139 = vmul.f32 %v122, %v138
    %v140 = vmul.f32 %v125, %v138
    %v141 = vmul.f32 %v128, %v138
    %v142 = vmul.f32 %v131, %v138
    %v143 = vrsqrt.pop %v139
    %v144 = vmul.f32 %v143, %v139
    %v145 = vmul.f32 %v144, %v143
    %v146 = vmul.f32 0.5, %v145
    %v147 = vsub.f32 1.5, %v146
    %v148 = vmul.f32 %v143, %v147
    %vm149 = vweird.f32 %v139
    %vm150 = vweird.f32 %v143
    %vm151 = vmor %vm149, %vm150
    %v152 = vsel %vm151, %v143, %v148
    %v153 = vrsqrt.pop %v140
    %v154 = vmul.f32 %v153, %v140
    %v155 = vmul.f32 %v154, %v153
    %v156 = vmul.f32 0.5, %v155
    %v157 = vsub.f32 1.5, %v156
    %v158 = vmul.f32 %v153, %v157
    %vm159 = vweird.f32 %v140
    %vm160 = vweird.f32 %v153
    %vm161 = vmor %vm159, %vm160
    %v162 = vsel %vm161, %v153, %v158
    %v163 = vrsqrt.pop %v141
    %v164 = vmul.f32 %v163, %v141
    %v165 = vmul.f32 %v164, %v163
    %v166 = vmul.f32 0.5, %v165
    %v167 = vsub.f32 1.5, %v166
    %v168 = vmul.f32 %v163, %v167
    %vm169 = vweird.f32 %v141
    %vm170 = vweird.f32 %v163
    %vm171 = vmor %vm169, %vm170
    %v172 = vsel %vm171, %v163, %v168
    %v173 = vrsqrt.pop %v142
    %v174 = vmul.f32 %v173, %v142
    %v175 = vmul.f32 %v174, %v173
    %v176 = vmul.f32 0.5, %v175
    %v177 = vsub.f32 1.5, %v176
    %v178 = vmul.f32 %v173, %v177
    %vm179 = vweird.f32 %v142
    %vm180 = vweird.f32 %v173
    %vm181 = vmor %vm179, %vm180
    %v182 = vsel %vm181, %v173, %v178
    %v183 = vmul.f32 %v107, %v152
    %v184 = vmul.f32 %v108, %v162
    %v185 = vmul.f32 %v109, %v172
    %v186 = vmul.f32 %v110, %v182
    %v187 = vld [vmem:[%s5] sm:$0xff]
    %v188 = vld [vmem:[%s5 + $0x8] sm:$0xff]
    %v189 = vld [vmem:[%s5 + $0x10] sm:$0xff]
    %v190 = vld [vmem:[%s5 + $0x18] sm:$0xff]
    %v192 = vsel %vm119, %v183, 0
    %v195 = vsel %vm119, %v184, 0
    %v198 = vsel %vm119, %v185, 0
    %v201 = vsel %vm119, %v186, 0
    %203 = vmatpush.msra.mxu0 0.0
    %204 = vmatpush.msra.mxu0 0.0
    %205 = vmatpush.msra.mxu0 0.0
    %206 = vmatpush.msra.mxu0 0.0
    %207 = vmatpush.msra.mxu0 0.0
    %208 = vmatpush.msra.mxu0 0.0
    %209 = vmatpush.msra.mxu0 0.0
    %210 = vmatpush.msra.mxu0 0.0
    %211 = vmatpush.msra.mxu0 0.0
    %212 = vmatpush.msra.mxu0 0.0
    %213 = vmatpush.msra.mxu0 0.0
    %214 = vmatpush.msra.mxu0 0.0
    %215 = vmatpush.msra.mxu0 %v190
    %216 = vmatpush.msra.mxu0 %v189
    %217 = vmatpush.msra.mxu0 %v188
    %218 = vmatpush.msra.mxu0 %v187
    %219 = vmatmul.f32.gmra.mxu0 %v192
    %v220 = vpop.f32.mrf.mxu0
    %v221 = vadd.f32 0.0, %v220
    %222 = vmatmul.f32.gmra.mxu0 %v195
    %v223 = vpop.f32.mrf.mxu0
    %v224 = vadd.f32 0.0, %v223
    %225 = vmatmul.f32.gmra.mxu0 %v198
    %v226 = vpop.f32.mrf.mxu0
    %v227 = vadd.f32 0.0, %v226
    %228 = vmatmul.f32.gmra.mxu0 %v201
    %v229 = vpop.f32.mrf.mxu0
    %v230 = vadd.f32 0.0, %v229
    %231 = vdwg.mxu0
    %v232 = vmul.f32 %v221, 0.25
    %v233 = vmul.f32 %v224, 0.25
    %v234 = vmul.f32 %v227, 0.25
    %v235 = vmul.f32 %v230, 0.25
    %v236 = vsel %vm119, %v232, -inf
    %237 = vmax.xlane.f32.xlu0 %v236
    %v238 = vpop.xlane.xlu0 %237
    %v239 = vsel %vm119, %v233, -inf
    %240 = vmax.xlane.f32.xlu0 %v239
    %v241 = vpop.xlane.xlu0 %240
    %v242 = vsel %vm119, %v234, -inf
    %243 = vmax.xlane.f32.xlu0 %v242
    %v244 = vpop.xlane.xlu0 %243
    %v245 = vsel %vm119, %v235, -inf
    %246 = vmax.xlane.f32.xlu0 %v245
    %v247 = vpop.xlane.xlu0 %246
    %v248 = vsub.f32 %v232, %v238
    %v249 = vsub.f32 %v233, %v241
    %v250 = vsub.f32 %v234, %v244
    %v251 = vsub.f32 %v235, %v247
    %v252 = vmul.f32 %v248, 1.442695
    %v253 = vpow.pop %v252
    %v254 = vmul.f32 %v249, 1.442695
    %v255 = vpow.pop %v254
    %v256 = vmul.f32 %v250, 1.442695
    %v257 = vpow.pop %v256
    %v258 = vmul.f32 %v251, 1.442695
    %v259 = vpow.pop %v258
    %v261 = vsel %vm119, %v253, 0
    %v264 = vsel %vm119, %v255, 0
    %v267 = vsel %vm119, %v257, 0
    %v270 = vsel %vm119, %v259, 0
    %272 = vmatpush.msra.mxu0 0.0
    %273 = vmatpush.msra.mxu0 0.0
    %274 = vmatpush.msra.mxu0 0.0
    %275 = vmatpush.msra.mxu0 0.0
    %276 = vmatpush.msra.mxu0 0.0
    %277 = vmatpush.msra.mxu0 0.0
    %278 = vmatpush.msra.mxu0 0.0
    %279 = vmatpush.msra.mxu0 0.0
    %280 = vmatpush.msra.mxu0 0.0
    %281 = vmatpush.msra.mxu0 0.0
    %282 = vmatpush.msra.mxu0 0.0
    %283 = vmatpush.msra.mxu0 0.0
    %284 = vmatpush.msra.mxu0 %v114
    %285 = vmatpush.msra.mxu0 %v113
    %286 = vmatpush.msra.mxu0 %v112
    %287 = vmatpush.msra.mxu0 %v111
    %288 = vmatmul.f32.gmra.mxu0 %v261
    %v289 = vpop.f32.mrf.mxu0
    %v290 = vadd.f32 0.0, %v289
    %291 = vmatmul.f32.gmra.mxu0 %v264
    %v292 = vpop.f32.mrf.mxu0
    %v293 = vadd.f32 0.0, %v292
    %294 = vmatmul.f32.gmra.mxu0 %v267
    %v295 = vpop.f32.mrf.mxu0
    %v296 = vadd.f32 0.0, %v295
    %297 = vmatmul.f32.gmra.mxu0 %v270
    %v298 = vpop.f32.mrf.mxu0
    %v299 = vadd.f32 0.0, %v298
    %300 = vdwg.mxu0
    %v301 = vrcp.pop %v290
    %v302 = vrcp.pop %v293
    %v303 = vrcp.pop %v296
    %v304 = vrcp.pop %v299
    %v305 = vmul.f32 %v253, %v301
    %v306 = vmul.f32 %v255, %v302
    %v307 = vmul.f32 %v257, %v303
    %v308 = vmul.f32 %v259, %v304
    %v309 = vld [vmem:[%s6] sm:$0xff]
    %v310 = vld [vmem:[%s6 + $0x8] sm:$0xff]
    %v311 = vld [vmem:[%s6 + $0x10] sm:$0xff]
    %v312 = vld [vmem:[%s6 + $0x18] sm:$0xff]
    %v314 = vsel %vm119, %v305, 0
    %v317 = vsel %vm119, %v306, 0
    %v320 = vsel %vm119, %v307, 0
    %v323 = vsel %vm119, %v308, 0
    %325 = vmatpush.msra.mxu0 0.0
    %326 = vmatpush.msra.mxu0 0.0
    %327 = vmatpush.msra.mxu0 0.0
    %328 = vmatpush.msra.mxu0 0.0
    %329 = vmatpush.msra.mxu0 0.0
    %330 = vmatpush.msra.mxu0 0.0
    %331 = vmatpush.msra.mxu0 0.0
    %332 = vmatpush.msra.mxu0 0.0
    %333 = vmatpush.msra.mxu0 0.0
    %334 = vmatpush.msra.mxu0 0.0
    %335 = vmatpush.msra.mxu0 0.0
    %336 = vmatpush.msra.mxu0 0.0
    %337 = vmatpush.msra.mxu0 %v312
    %338 = vmatpush.msra.mxu0 %v311
    %339 = vmatpush.msra.mxu0 %v310
    %340 = vmatpush.msra.mxu0 %v309
    %341 = vmatmul.f32.gmra.mxu0 %v314
    %v342 = vpop.f32.mrf.mxu0
    %v343 = vadd.f32 0.0, %v342
    %344 = vmatmul.f32.gmra.mxu0 %v317
    %v345 = vpop.f32.mrf.mxu0
    %v346 = vadd.f32 0.0, %v345
    %347 = vmatmul.f32.gmra.mxu0 %v320
    %v348 = vpop.f32.mrf.mxu0
    %v349 = vadd.f32 0.0, %v348
    %350 = vmatmul.f32.gmra.mxu0 %v323
    %v351 = vpop.f32.mrf.mxu0
    %v352 = vadd.f32 0.0, %v351
    %353 = vdwg.mxu0
    %v354 = vadd.f32 %v107, %v343
    %v355 = vadd.f32 %v108, %v346
    %v356 = vadd.f32 %v109, %v349
    %v357 = vadd.f32 %v110, %v352
    %v358 = vmul.f32 %v354, %v354
    %v359 = vmul.f32 %v355, %v355
    %v360 = vmul.f32 %v356, %v356
    %v361 = vmul.f32 %v357, %v357
    %v362 = vsel %vm119, %v358, 0.0
    %363 = vadd.xlane.f32.xlu0 %v362
    %v364 = vpop.xlane.xlu0 %363
    %v365 = vsel %vm119, %v359, 0.0
    %366 = vadd.xlane.f32.xlu0 %v365
    %v367 = vpop.xlane.xlu0 %366
    %v368 = vsel %vm119, %v360, 0.0
    %369 = vadd.xlane.f32.xlu0 %v368
    %v370 = vpop.xlane.xlu0 %369
    %v371 = vsel %vm119, %v361, 0.0
    %372 = vadd.xlane.f32.xlu0 %v371
    %v373 = vpop.xlane.xlu0 %372
    %v374 = vmul.f32 %v364, %v138
    %v375 = vmul.f32 %v367, %v138
    %v376 = vmul.f32 %v370, %v138
    %v377 = vmul.f32 %v373, %v138
    %v378 = vrsqrt.pop %v374
    %v379 = vmul.f32 %v378, %v374
    %v380 = vmul.f32 %v379, %v378
    %v381 = vmul.f32 0.5, %v380
    %v382 = vsub.f32 1.5, %v381
    %v383 = vmul.f32 %v378, %v382
    %vm384 = vweird.f32 %v374
    %vm385 = vweird.f32 %v378
    %vm386 = vmor %vm384, %vm385
    %v387 = vsel %vm386, %v378, %v383
    %v388 = vrsqrt.pop %v375
    %v389 = vmul.f32 %v388, %v375
    %v390 = vmul.f32 %v389, %v388
    %v391 = vmul.f32 0.5, %v390
    %v392 = vsub.f32 1.5, %v391
    %v393 = vmul.f32 %v388, %v392
    %vm394 = vweird.f32 %v375
    %vm395 = vweird.f32 %v388
    %vm396 = vmor %vm394, %vm395
    %v397 = vsel %vm396, %v388, %v393
    %v398 = vrsqrt.pop %v376
    %v399 = vmul.f32 %v398, %v376
    %v400 = vmul.f32 %v399, %v398
    %v401 = vmul.f32 0.5, %v400
    %v402 = vsub.f32 1.5, %v401
    %v403 = vmul.f32 %v398, %v402
    %vm404 = vweird.f32 %v376
    %vm405 = vweird.f32 %v398
    %vm406 = vmor %vm404, %vm405
    %v407 = vsel %vm406, %v398, %v403
    %v408 = vrsqrt.pop %v377
    %v409 = vmul.f32 %v408, %v377
    %v410 = vmul.f32 %v409, %v408
    %v411 = vmul.f32 0.5, %v410
    %v412 = vsub.f32 1.5, %v411
    %v413 = vmul.f32 %v408, %v412
    %vm414 = vweird.f32 %v377
    %vm415 = vweird.f32 %v408
    %vm416 = vmor %vm414, %vm415
    %v417 = vsel %vm416, %v408, %v413
    %v418 = vmul.f32 %v354, %v387
    %v419 = vmul.f32 %v355, %v397
    %v420 = vmul.f32 %v356, %v407
    %v421 = vmul.f32 %v357, %v417
    %v422 = vld [vmem:[%s7] sm:$0xff]
    %v423 = vld [vmem:[%s7 + $0x8] sm:$0xff]
    %v424 = vld [vmem:[%s7 + $0x10] sm:$0xff]
    %v425 = vld [vmem:[%s7 + $0x18] sm:$0xff]
    %v426 = vld [vmem:[%s8] sm:$0x1]
    %v428 = vperm.slane %v426, 0
    %v431 = vsel %vm119, %v418, 0
    %v434 = vsel %vm119, %v419, 0
    %v437 = vsel %vm119, %v420, 0
    %v440 = vsel %vm119, %v421, 0
    %442 = vmatpush.msra.mxu0 0.0
    %443 = vmatpush.msra.mxu0 0.0
    %444 = vmatpush.msra.mxu0 0.0
    %445 = vmatpush.msra.mxu0 0.0
    %446 = vmatpush.msra.mxu0 0.0
    %447 = vmatpush.msra.mxu0 0.0
    %448 = vmatpush.msra.mxu0 0.0
    %449 = vmatpush.msra.mxu0 0.0
    %450 = vmatpush.msra.mxu0 0.0
    %451 = vmatpush.msra.mxu0 0.0
    %452 = vmatpush.msra.mxu0 0.0
    %453 = vmatpush.msra.mxu0 0.0
    %454 = vmatpush.msra.mxu0 %v425
    %455 = vmatpush.msra.mxu0 %v424
    %456 = vmatpush.msra.mxu0 %v423
    %457 = vmatpush.msra.mxu0 %v422
    %458 = vmatmul.f32.gmra.mxu0 %v431
    %v459 = vpop.f32.mrf.mxu0
    %v460 = vadd.f32 %v428, %v459
    %461 = vmatmul.f32.gmra.mxu0 %v434
    %v462 = vpop.f32.mrf.mxu0
    %v463 = vadd.f32 %v428, %v462
    %464 = vmatmul.f32.gmra.mxu0 %v437
    %v465 = vpop.f32.mrf.mxu0
    %v466 = vadd.f32 %v428, %v465
    %467 = vmatmul.f32.gmra.mxu0 %v440
    %v468 = vpop.f32.mrf.mxu0
    %v469 = vadd.f32 %v428, %v468
    %470 = vdwg.mxu0
    %v471 = vmul.f32 %v460, 0.5
    %v472 = vmul.f32 %v463, 0.5
    %v473 = vmul.f32 %v466, 0.5
    %v474 = vmul.f32 %v469, 0.5
    %v475 = vtanh.pop %v471
    %v476 = vtanh.pop %v472
    %v477 = vtanh.pop %v473
    %v478 = vtanh.pop %v474
    %v479 = vadd.f32 %v475, 1.0
    %v480 = vadd.f32 %v476, 1.0
    %v481 = vadd.f32 %v477, 1.0
    %v482 = vadd.f32 %v478, 1.0
    %v483 = vmul.f32 %v479, 0.5
    %v484 = vmul.f32 %v480, 0.5
    %v485 = vmul.f32 %v481, 0.5
    %v486 = vmul.f32 %v482, 0.5
    %v487 = vmul.f32 %v460, %v483
    %v488 = vmul.f32 %v463, %v484
    %v489 = vmul.f32 %v466, %v485
    %v490 = vmul.f32 %v469, %v486
    %v491 = vld [vmem:[%s9] sm:$0xff]
    %v492 = vld [vmem:[%s9 + $0x8] sm:$0xff]
    %v493 = vld [vmem:[%s9 + $0x10] sm:$0xff]
    %v494 = vld [vmem:[%s9 + $0x18] sm:$0xff]
    %v495 = vld [vmem:[%s9 + $0x20] sm:$0xff]
    %v496 = vld [vmem:[%s9 + $0x28] sm:$0xff]
    %v497 = vld [vmem:[%s9 + $0x30] sm:$0xff]
    %v498 = vld [vmem:[%s9 + $0x38] sm:$0xff]
    %v499 = vld [vmem:[%s9 + $0x40] sm:$0xff]
    %v500 = vld [vmem:[%s9 + $0x48] sm:$0xff]
    %v501 = vld [vmem:[%s9 + $0x50] sm:$0xff]
    %v502 = vld [vmem:[%s9 + $0x58] sm:$0xff]
    %v503 = vld [vmem:[%s10] sm:$0x1]
    %v505 = vperm.slane %v503, 0
    %vm507 = vcmask 785408
    %v509 = vsel %vm507, %v487, 0
    %v512 = vsel %vm507, %v488, 0
    %v515 = vsel %vm507, %v489, 0
    %v518 = vsel %vm507, %v490, 0
    %520 = vmatpush.msra.mxu0 0.0
    %521 = vmatpush.msra.mxu0 0.0
    %522 = vmatpush.msra.mxu0 0.0
    %523 = vmatpush.msra.mxu0 0.0
    %524 = vmatpush.msra.mxu0 %v502
    %525 = vmatpush.msra.mxu0 %v501
    %526 = vmatpush.msra.mxu0 %v500
    %527 = vmatpush.msra.mxu0 %v499
    %528 = vmatpush.msra.mxu0 %v498
    %529 = vmatpush.msra.mxu0 %v497
    %530 = vmatpush.msra.mxu0 %v496
    %531 = vmatpush.msra.mxu0 %v495
    %532 = vmatpush.msra.mxu0 %v494
    %533 = vmatpush.msra.mxu0 %v493
    %534 = vmatpush.msra.mxu0 %v492
    %535 = vmatpush.msra.mxu0 %v491
    %536 = vmatmul.f32.gmra.mxu0 %v509
    %v537 = vpop.f32.mrf.mxu0
    %v538 = vadd.f32 %v505, %v537
    %539 = vmatmul.f32.gmra.mxu0 %v512
    %v540 = vpop.f32.mrf.mxu0
    %v541 = vadd.f32 %v505, %v540
    %542 = vmatmul.f32.gmra.mxu0 %v515
    %v543 = vpop.f32.mrf.mxu0
    %v544 = vadd.f32 %v505, %v543
    %545 = vmatmul.f32.gmra.mxu0 %v518
    %v546 = vpop.f32.mrf.mxu0
    %v547 = vadd.f32 %v505, %v546
    %548 = vdwg.mxu0
    %v549 = vmul.f32 %v538, 0.5
    %v550 = vmul.f32 %v541, 0.5
    %v551 = vmul.f32 %v544, 0.5
    %v552 = vmul.f32 %v547, 0.5
    %v553 = vtanh.pop %v549
    %v554 = vtanh.pop %v550
    %v555 = vtanh.pop %v551
    %v556 = vtanh.pop %v552
    %v557 = vadd.f32 %v553, 1.0
    %v558 = vadd.f32 %v554, 1.0
    %v559 = vadd.f32 %v555, 1.0
    %v560 = vadd.f32 %v556, 1.0
    %v561 = vmul.f32 %v557, 0.5
    %v562 = vmul.f32 %v558, 0.5
    %v563 = vmul.f32 %v559, 0.5
    %v564 = vmul.f32 %v560, 0.5
    %v565 = vmul.f32 %v538, %v561
    %v566 = vmul.f32 %v541, %v562
    %v567 = vmul.f32 %v544, %v563
    %v568 = vmul.f32 %v547, %v564
    %v569 = vadd.f32 %v354, %v565
    %v570 = vadd.f32 %v355, %v566
    %v571 = vadd.f32 %v356, %v567
    %v572 = vadd.f32 %v357, %v568
    %v573 = vmul.f32 %v569, %v569
    %v574 = vmul.f32 %v570, %v570
    %v575 = vmul.f32 %v571, %v571
    %v576 = vmul.f32 %v572, %v572
    %v577 = vsel %vm119, %v573, 0.0
    %578 = vadd.xlane.f32.xlu0 %v577
    %v579 = vpop.xlane.xlu0 %578
    %v580 = vsel %vm119, %v574, 0.0
    %581 = vadd.xlane.f32.xlu0 %v580
    %v582 = vpop.xlane.xlu0 %581
    %v583 = vsel %vm119, %v575, 0.0
    %584 = vadd.xlane.f32.xlu0 %v583
    %v585 = vpop.xlane.xlu0 %584
    %v586 = vsel %vm119, %v576, 0.0
    %587 = vadd.xlane.f32.xlu0 %v586
    %v588 = vpop.xlane.xlu0 %587
    %v589 = vmul.f32 %v579, %v138
    %v590 = vmul.f32 %v582, %v138
    %v591 = vmul.f32 %v585, %v138
    %v592 = vmul.f32 %v588, %v138
    %v593 = vrsqrt.pop %v589
    %v594 = vmul.f32 %v593, %v589
    %v595 = vmul.f32 %v594, %v593
    %v596 = vmul.f32 0.5, %v595
    %v597 = vsub.f32 1.5, %v596
    %v598 = vmul.f32 %v593, %v597
    %vm599 = vweird.f32 %v589
    %vm600 = vweird.f32 %v593
    %vm601 = vmor %vm599, %vm600
    %v602 = vsel %vm601, %v593, %v598
    %v603 = vrsqrt.pop %v590
    %v604 = vmul.f32 %v603, %v590
    %v605 = vmul.f32 %v604, %v603
    %v606 = vmul.f32 0.5, %v605
    %v607 = vsub.f32 1.5, %v606
    %v608 = vmul.f32 %v603, %v607
    %vm609 = vweird.f32 %v590
    %vm610 = vweird.f32 %v603
    %vm611 = vmor %vm609, %vm610
    %v612 = vsel %vm611, %v603, %v608
    %v613 = vrsqrt.pop %v591
    %v614 = vmul.f32 %v613, %v591
    %v615 = vmul.f32 %v614, %v613
    %v616 = vmul.f32 0.5, %v615
    %v617 = vsub.f32 1.5, %v616
    %v618 = vmul.f32 %v613, %v617
    %vm619 = vweird.f32 %v591
    %vm620 = vweird.f32 %v613
    %vm621 = vmor %vm619, %vm620
    %v622 = vsel %vm621, %v613, %v618
    %v623 = vrsqrt.pop %v592
    %v624 = vmul.f32 %v623, %v592
    %v625 = vmul.f32 %v624, %v623
    %v626 = vmul.f32 0.5, %v625
    %v627 = vsub.f32 1.5, %v626
    %v628 = vmul.f32 %v623, %v627
    %vm629 = vweird.f32 %v592
    %vm630 = vweird.f32 %v623
    %vm631 = vmor %vm629, %vm630
    %v632 = vsel %vm631, %v623, %v628
    %v633 = vmul.f32 %v569, %v602
    %v634 = vmul.f32 %v570, %v612
    %v635 = vmul.f32 %v571, %v622
    %v636 = vmul.f32 %v572, %v632
    %s637 = scalar_lea.vmem %s5, 32
    %v638 = vld [vmem:[%s637] sm:$0xff]
    %v639 = vld [vmem:[%s637 + $0x8] sm:$0xff]
    %v640 = vld [vmem:[%s637 + $0x10] sm:$0xff]
    %v641 = vld [vmem:[%s637 + $0x18] sm:$0xff]
    %v643 = vsel %vm119, %v633, 0
    %v646 = vsel %vm119, %v634, 0
    %v649 = vsel %vm119, %v635, 0
    %v652 = vsel %vm119, %v636, 0
    %654 = vmatpush.msra.mxu0 0.0
    %655 = vmatpush.msra.mxu0 0.0
    %656 = vmatpush.msra.mxu0 0.0
    %657 = vmatpush.msra.mxu0 0.0
    %658 = vmatpush.msra.mxu0 0.0
    %659 = vmatpush.msra.mxu0 0.0
    %660 = vmatpush.msra.mxu0 0.0
    %661 = vmatpush.msra.mxu0 0.0
    %662 = vmatpush.msra.mxu0 0.0
    %663 = vmatpush.msra.mxu0 0.0
    %664 = vmatpush.msra.mxu0 0.0
    %665 = vmatpush.msra.mxu0 0.0
    %666 = vmatpush.msra.mxu0 %v641
    %667 = vmatpush.msra.mxu0 %v640
    %668 = vmatpush.msra.mxu0 %v639
    %669 = vmatpush.msra.mxu0 %v638
    %670 = vmatmul.f32.gmra.mxu0 %v643
    %v671 = vpop.f32.mrf.mxu0
    %v672 = vadd.f32 0.0, %v671
    %673 = vmatmul.f32.gmra.mxu0 %v646
    %v674 = vpop.f32.mrf.mxu0
    %v675 = vadd.f32 0.0, %v674
    %676 = vmatmul.f32.gmra.mxu0 %v649
    %v677 = vpop.f32.mrf.mxu0
    %v678 = vadd.f32 0.0, %v677
    %679 = vmatmul.f32.gmra.mxu0 %v652
    %v680 = vpop.f32.mrf.mxu0
    %v681 = vadd.f32 0.0, %v680
    %682 = vdwg.mxu0
    %v683 = vmul.f32 %v672, 0.25
    %v684 = vmul.f32 %v675, 0.25
    %v685 = vmul.f32 %v678, 0.25
    %v686 = vmul.f32 %v681, 0.25
    %v687 = vsel %vm119, %v683, -inf
    %688 = vmax.xlane.f32.xlu0 %v687
    %v689 = vpop.xlane.xlu0 %688
    %v690 = vsel %vm119, %v684, -inf
    %691 = vmax.xlane.f32.xlu0 %v690
    %v692 = vpop.xlane.xlu0 %691
    %v693 = vsel %vm119, %v685, -inf
    %694 = vmax.xlane.f32.xlu0 %v693
    %v695 = vpop.xlane.xlu0 %694
    %v696 = vsel %vm119, %v686, -inf
    %697 = vmax.xlane.f32.xlu0 %v696
    %v698 = vpop.xlane.xlu0 %697
    %v699 = vsub.f32 %v683, %v689
    %v700 = vsub.f32 %v684, %v692
    %v701 = vsub.f32 %v685, %v695
    %v702 = vsub.f32 %v686, %v698
    %v703 = vmul.f32 %v699, 1.442695
    %v704 = vpow.pop %v703
    %v705 = vmul.f32 %v700, 1.442695
    %v706 = vpow.pop %v705
    %v707 = vmul.f32 %v701, 1.442695
    %v708 = vpow.pop %v707
    %v709 = vmul.f32 %v702, 1.442695
    %v710 = vpow.pop %v709
    %v712 = vsel %vm119, %v704, 0
    %v715 = vsel %vm119, %v706, 0
    %v718 = vsel %vm119, %v708, 0
    %v721 = vsel %vm119, %v710, 0
    %723 = vmatpush.msra.mxu0 0.0
    %724 = vmatpush.msra.mxu0 0.0
    %725 = vmatpush.msra.mxu0 0.0
    %726 = vmatpush.msra.mxu0 0.0
    %727 = vmatpush.msra.mxu0 0.0
    %728 = vmatpush.msra.mxu0 0.0
    %729 = vmatpush.msra.mxu0 0.0
    %730 = vmatpush.msra.mxu0 0.0
    %731 = vmatpush.msra.mxu0 0.0
    %732 = vmatpush.msra.mxu0 0.0
    %733 = vmatpush.msra.mxu0 0.0
    %734 = vmatpush.msra.mxu0 0.0
    %735 = vmatpush.msra.mxu0 %v114
    %736 = vmatpush.msra.mxu0 %v113
    %737 = vmatpush.msra.mxu0 %v112
    %738 = vmatpush.msra.mxu0 %v111
    %739 = vmatmul.f32.gmra.mxu0 %v712
    %v740 = vpop.f32.mrf.mxu0
    %v741 = vadd.f32 0.0, %v740
    %742 = vmatmul.f32.gmra.mxu0 %v715
    %v743 = vpop.f32.mrf.mxu0
    %v744 = vadd.f32 0.0, %v743
    %745 = vmatmul.f32.gmra.mxu0 %v718
    %v746 = vpop.f32.mrf.mxu0
    %v747 = vadd.f32 0.0, %v746
    %748 = vmatmul.f32.gmra.mxu0 %v721
    %v749 = vpop.f32.mrf.mxu0
    %v750 = vadd.f32 0.0, %v749
    %751 = vdwg.mxu0
    %v752 = vrcp.pop %v741
    %v753 = vrcp.pop %v744
    %v754 = vrcp.pop %v747
    %v755 = vrcp.pop %v750
    %v756 = vmul.f32 %v704, %v752
    %v757 = vmul.f32 %v706, %v753
    %v758 = vmul.f32 %v708, %v754
    %v759 = vmul.f32 %v710, %v755
    %s760 = scalar_lea.vmem %s6, 32
    %v761 = vld [vmem:[%s760] sm:$0xff]
    %v762 = vld [vmem:[%s760 + $0x8] sm:$0xff]
    %v763 = vld [vmem:[%s760 + $0x10] sm:$0xff]
    %v764 = vld [vmem:[%s760 + $0x18] sm:$0xff]
    %v766 = vsel %vm119, %v756, 0
    %v769 = vsel %vm119, %v757, 0
    %v772 = vsel %vm119, %v758, 0
    %v775 = vsel %vm119, %v759, 0
    %777 = vmatpush.msra.mxu0 0.0
    %778 = vmatpush.msra.mxu0 0.0
    %779 = vmatpush.msra.mxu0 0.0
    %780 = vmatpush.msra.mxu0 0.0
    %781 = vmatpush.msra.mxu0 0.0
    %782 = vmatpush.msra.mxu0 0.0
    %783 = vmatpush.msra.mxu0 0.0
    %784 = vmatpush.msra.mxu0 0.0
    %785 = vmatpush.msra.mxu0 0.0
    %786 = vmatpush.msra.mxu0 0.0
    %787 = vmatpush.msra.mxu0 0.0
    %788 = vmatpush.msra.mxu0 0.0
    %789 = vmatpush.msra.mxu0 %v764
    %790 = vmatpush.msra.mxu0 %v763
    %791 = vmatpush.msra.mxu0 %v762
    %792 = vmatpush.msra.mxu0 %v761
    %793 = vmatmul.f32.gmra.mxu0 %v766
    %v794 = vpop.f32.mrf.mxu0
    %v795 = vadd.f32 0.0, %v794
    %796 = vmatmul.f32.gmra.mxu0 %v769
    %v797 = vpop.f32.mrf.mxu0
    %v798 = vadd.f32 0.0, %v797
    %799 = vmatmul.f32.gmra.mxu0 %v772
    %v800 = vpop.f32.mrf.mxu0
    %v801 = vadd.f32 0.0, %v800
    %802 = vmatmul.f32.gmra.mxu0 %v775
    %v803 = vpop.f32.mrf.mxu0
    %v804 = vadd.f32 0.0, %v803
    %805 = vdwg.mxu0
    %v806 = vadd.f32 %v569, %v795
    %v807 = vadd.f32 %v570, %v798
    %v808 = vadd.f32 %v571, %v801
    %v809 = vadd.f32 %v572, %v804
    %v810 = vmul.f32 %v806, %v806
    %v811 = vmul.f32 %v807, %v807
    %v812 = vmul.f32 %v808, %v808
    %v813 = vmul.f32 %v809, %v809
    %v814 = vsel %vm119, %v810, 0.0
    %815 = vadd.xlane.f32.xlu0 %v814
    %v816 = vpop.xlane.xlu0 %815
    %v817 = vsel %vm119, %v811, 0.0
    %818 = vadd.xlane.f32.xlu0 %v817
    %v819 = vpop.xlane.xlu0 %818
    %v820 = vsel %vm119, %v812, 0.0
    %821 = vadd.xlane.f32.xlu0 %v820
    %v822 = vpop.xlane.xlu0 %821
    %v823 = vsel %vm119, %v813, 0.0
    %824 = vadd.xlane.f32.xlu0 %v823
    %v825 = vpop.xlane.xlu0 %824
    %v826 = vmul.f32 %v816, %v138
    %v827 = vmul.f32 %v819, %v138
    %v828 = vmul.f32 %v822, %v138
    %v829 = vmul.f32 %v825, %v138
    %v830 = vrsqrt.pop %v826
    %v831 = vmul.f32 %v830, %v826
    %v832 = vmul.f32 %v831, %v830
    %v833 = vmul.f32 0.5, %v832
    %v834 = vsub.f32 1.5, %v833
    %v835 = vmul.f32 %v830, %v834
    %vm836 = vweird.f32 %v826
    %vm837 = vweird.f32 %v830
    %vm838 = vmor %vm836, %vm837
    %v839 = vsel %vm838, %v830, %v835
    %v840 = vrsqrt.pop %v827
    %v841 = vmul.f32 %v840, %v827
    %v842 = vmul.f32 %v841, %v840
    %v843 = vmul.f32 0.5, %v842
    %v844 = vsub.f32 1.5, %v843
    %v845 = vmul.f32 %v840, %v844
    %vm846 = vweird.f32 %v827
    %vm847 = vweird.f32 %v840
    %vm848 = vmor %vm846, %vm847
    %v849 = vsel %vm848, %v840, %v845
    %v850 = vrsqrt.pop %v828
    %v851 = vmul.f32 %v850, %v828
    %v852 = vmul.f32 %v851, %v850
    %v853 = vmul.f32 0.5, %v852
    %v854 = vsub.f32 1.5, %v853
    %v855 = vmul.f32 %v850, %v854
    %vm856 = vweird.f32 %v828
    %vm857 = vweird.f32 %v850
    %vm858 = vmor %vm856, %vm857
    %v859 = vsel %vm858, %v850, %v855
    %v860 = vrsqrt.pop %v829
    %v861 = vmul.f32 %v860, %v829
    %v862 = vmul.f32 %v861, %v860
    %v863 = vmul.f32 0.5, %v862
    %v864 = vsub.f32 1.5, %v863
    %v865 = vmul.f32 %v860, %v864
    %vm866 = vweird.f32 %v829
    %vm867 = vweird.f32 %v860
    %vm868 = vmor %vm866, %vm867
    %v869 = vsel %vm868, %v860, %v865
    %v870 = vmul.f32 %v806, %v839
    %v871 = vmul.f32 %v807, %v849
    %v872 = vmul.f32 %v808, %v859
    %v873 = vmul.f32 %v809, %v869
    %s874 = scalar_lea.vmem %s7, 32
    %v875 = vld [vmem:[%s874] sm:$0xff]
    %v876 = vld [vmem:[%s874 + $0x8] sm:$0xff]
    %v877 = vld [vmem:[%s874 + $0x10] sm:$0xff]
    %v878 = vld [vmem:[%s874 + $0x18] sm:$0xff]
    %s879 = scalar_lea.vmem %s8, 1
    %v880 = vld [vmem:[%s879] sm:$0x1]
    %v882 = vperm.slane %v880, 0
    %v885 = vsel %vm119, %v870, 0
    %v888 = vsel %vm119, %v871, 0
    %v891 = vsel %vm119, %v872, 0
    %v894 = vsel %vm119, %v873, 0
    %896 = vmatpush.msra.mxu0 0.0
    %897 = vmatpush.msra.mxu0 0.0
    %898 = vmatpush.msra.mxu0 0.0
    %899 = vmatpush.msra.mxu0 0.0
    %900 = vmatpush.msra.mxu0 0.0
    %901 = vmatpush.msra.mxu0 0.0
    %902 = vmatpush.msra.mxu0 0.0
    %903 = vmatpush.msra.mxu0 0.0
    %904 = vmatpush.msra.mxu0 0.0
    %905 = vmatpush.msra.mxu0 0.0
    %906 = vmatpush.msra.mxu0 0.0
    %907 = vmatpush.msra.mxu0 0.0
    %908 = vmatpush.msra.mxu0 %v878
    %909 = vmatpush.msra.mxu0 %v877
    %910 = vmatpush.msra.mxu0 %v876
    %911 = vmatpush.msra.mxu0 %v875
    %912 = vmatmul.f32.gmra.mxu0 %v885
    %v913 = vpop.f32.mrf.mxu0
    %v914 = vadd.f32 %v882, %v913
    %915 = vmatmul.f32.gmra.mxu0 %v888
    %v916 = vpop.f32.mrf.mxu0
    %v917 = vadd.f32 %v882, %v916
    %918 = vmatmul.f32.gmra.mxu0 %v891
    %v919 = vpop.f32.mrf.mxu0
    %v920 = vadd.f32 %v882, %v919
    %921 = vmatmul.f32.gmra.mxu0 %v894
    %v922 = vpop.f32.mrf.mxu0
    %v923 = vadd.f32 %v882, %v922
    %924 = vdwg.mxu0
    %v925 = vmul.f32 %v914, 0.5
    %v926 = vmul.f32 %v917, 0.5
    %v927 = vmul.f32 %v920, 0.5
    %v928 = vmul.f32 %v923, 0.5
    %v929 = vtanh.pop %v925
    %v930 = vtanh.pop %v926
    %v931 = vtanh.pop %v927
    %v932 = vtanh.pop %v928
    %v933 = vadd.f32 %v929, 1.0
    %v934 = vadd.f32 %v930, 1.0
    %v935 = vadd.f32 %v931, 1.0
    %v936 = vadd.f32 %v932, 1.0
    %v937 = vmul.f32 %v933, 0.5
    %v938 = vmul.f32 %v934, 0.5
    %v939 = vmul.f32 %v935, 0.5
    %v940 = vmul.f32 %v936, 0.5
    %v941 = vmul.f32 %v914, %v937
    %v942 = vmul.f32 %v917, %v938
    %v943 = vmul.f32 %v920, %v939
    %v944 = vmul.f32 %v923, %v940
    %s945 = scalar_lea.vmem %s9, 96
    %v946 = vld [vmem:[%s945] sm:$0xff]
    %v947 = vld [vmem:[%s945 + $0x8] sm:$0xff]
    %v948 = vld [vmem:[%s945 + $0x10] sm:$0xff]
    %v949 = vld [vmem:[%s945 + $0x18] sm:$0xff]
    %v950 = vld [vmem:[%s945 + $0x20] sm:$0xff]
    %v951 = vld [vmem:[%s945 + $0x28] sm:$0xff]
    %v952 = vld [vmem:[%s945 + $0x30] sm:$0xff]
    %v953 = vld [vmem:[%s945 + $0x38] sm:$0xff]
    %v954 = vld [vmem:[%s945 + $0x40] sm:$0xff]
    %v955 = vld [vmem:[%s945 + $0x48] sm:$0xff]
    %v956 = vld [vmem:[%s945 + $0x50] sm:$0xff]
    %v957 = vld [vmem:[%s945 + $0x58] sm:$0xff]
    %s958 = scalar_lea.vmem %s10, 1
    %v959 = vld [vmem:[%s958] sm:$0x1]
    %v961 = vperm.slane %v959, 0
    %v964 = vsel %vm507, %v941, 0
    %v967 = vsel %vm507, %v942, 0
    %v970 = vsel %vm507, %v943, 0
    %v973 = vsel %vm507, %v944, 0
    %975 = vmatpush.msra.mxu0 0.0
    %976 = vmatpush.msra.mxu0 0.0
    %977 = vmatpush.msra.mxu0 0.0
    %978 = vmatpush.msra.mxu0 0.0
    %979 = vmatpush.msra.mxu0 %v957
    %980 = vmatpush.msra.mxu0 %v956
    %981 = vmatpush.msra.mxu0 %v955
    %982 = vmatpush.msra.mxu0 %v954
    %983 = vmatpush.msra.mxu0 %v953
    %984 = vmatpush.msra.mxu0 %v952
    %985 = vmatpush.msra.mxu0 %v951
    %986 = vmatpush.msra.mxu0 %v950
    %987 = vmatpush.msra.mxu0 %v949
    %988 = vmatpush.msra.mxu0 %v948
    %989 = vmatpush.msra.mxu0 %v947
    %990 = vmatpush.msra.mxu0 %v946
    %991 = vmatmul.f32.gmra.mxu0 %v964
    %v992 = vpop.f32.mrf.mxu0
    %v993 = vadd.f32 %v961, %v992
    %994 = vmatmul.f32.gmra.mxu0 %v967
    %v995 = vpop.f32.mrf.mxu0
    %v996 = vadd.f32 %v961, %v995
    %997 = vmatmul.f32.gmra.mxu0 %v970
    %v998 = vpop.f32.mrf.mxu0
    %v999 = vadd.f32 %v961, %v998
    %1000 = vmatmul.f32.gmra.mxu0 %v973
    %v1001 = vpop.f32.mrf.mxu0
    %v1002 = vadd.f32 %v961, %v1001
    %1003 = vdwg.mxu0
    %v1004 = vmul.f32 %v993, 0.5
    %v1005 = vmul.f32 %v996, 0.5
    %v1006 = vmul.f32 %v999, 0.5
    %v1007 = vmul.f32 %v1002, 0.5
    %v1008 = vtanh.pop %v1004
    %v1009 = vtanh.pop %v1005
    %v1010 = vtanh.pop %v1006
    %v1011 = vtanh.pop %v1007
    %v1012 = vadd.f32 %v1008, 1.0
    %v1013 = vadd.f32 %v1009, 1.0
    %v1014 = vadd.f32 %v1010, 1.0
    %v1015 = vadd.f32 %v1011, 1.0
    %v1016 = vmul.f32 %v1012, 0.5
    %v1017 = vmul.f32 %v1013, 0.5
    %v1018 = vmul.f32 %v1014, 0.5
    %v1019 = vmul.f32 %v1015, 0.5
    %v1020 = vmul.f32 %v993, %v1016
    %v1021 = vmul.f32 %v996, %v1017
    %v1022 = vmul.f32 %v999, %v1018
    %v1023 = vmul.f32 %v1002, %v1019
    %v1024 = vadd.f32 %v806, %v1020
    %v1025 = vadd.f32 %v807, %v1021
    %v1026 = vadd.f32 %v808, %v1022
    %v1027 = vadd.f32 %v809, %v1023
    %1028 = vst.msk [vmem:[#allocation2] sm:$0xff] %vm119, %v1024
    %1029 = vst.msk [vmem:[#allocation2 + $0x8] sm:$0xff] %vm119, %v1025
    %1030 = vst.msk [vmem:[#allocation2 + $0x10] sm:$0xff] %vm119, %v1026
    %1031 = vst.msk [vmem:[#allocation2 + $0x18] sm:$0xff] %vm119, %v1027
    %v1032 = vmul.f32 %v1024, %v1024
    %v1033 = vmul.f32 %v1025, %v1025
    %v1034 = vmul.f32 %v1026, %v1026
    %v1035 = vmul.f32 %v1027, %v1027
    %v1036 = vsel %vm119, %v1032, 0.0
    %1037 = vadd.xlane.f32.xlu0 %v1036
    %v1038 = vpop.xlane.xlu0 %1037
    %v1039 = vsel %vm119, %v1033, 0.0
    %1040 = vadd.xlane.f32.xlu0 %v1039
    %v1041 = vpop.xlane.xlu0 %1040
    %v1042 = vsel %vm119, %v1034, 0.0
    %1043 = vadd.xlane.f32.xlu0 %v1042
    %v1044 = vpop.xlane.xlu0 %1043
    %v1045 = vsel %vm119, %v1035, 0.0
    %1046 = vadd.xlane.f32.xlu0 %v1045
    %v1047 = vpop.xlane.xlu0 %1046
    %v1048 = vmul.f32 %v1038, %v138
    %v1049 = vmul.f32 %v1041, %v138
    %v1050 = vmul.f32 %v1044, %v138
    %v1051 = vmul.f32 %v1047, %v138
    %v1052 = vrsqrt.pop %v1048
    %v1053 = vmul.f32 %v1052, %v1048
    %v1054 = vmul.f32 %v1053, %v1052
    %v1055 = vmul.f32 0.5, %v1054
    %v1056 = vsub.f32 1.5, %v1055
    %v1057 = vmul.f32 %v1052, %v1056
    %vm1058 = vweird.f32 %v1048
    %vm1059 = vweird.f32 %v1052
    %vm1060 = vmor %vm1058, %vm1059
    %v1061 = vsel %vm1060, %v1052, %v1057
    %v1062 = vrsqrt.pop %v1049
    %v1063 = vmul.f32 %v1062, %v1049
    %v1064 = vmul.f32 %v1063, %v1062
    %v1065 = vmul.f32 0.5, %v1064
    %v1066 = vsub.f32 1.5, %v1065
    %v1067 = vmul.f32 %v1062, %v1066
    %vm1068 = vweird.f32 %v1049
    %vm1069 = vweird.f32 %v1062
    %vm1070 = vmor %vm1068, %vm1069
    %v1071 = vsel %vm1070, %v1062, %v1067
    %v1072 = vrsqrt.pop %v1050
    %v1073 = vmul.f32 %v1072, %v1050
    %v1074 = vmul.f32 %v1073, %v1072
    %v1075 = vmul.f32 0.5, %v1074
    %v1076 = vsub.f32 1.5, %v1075
    %v1077 = vmul.f32 %v1072, %v1076
    %vm1078 = vweird.f32 %v1050
    %vm1079 = vweird.f32 %v1072
    %vm1080 = vmor %vm1078, %vm1079
    %v1081 = vsel %vm1080, %v1072, %v1077
    %v1082 = vrsqrt.pop %v1051
    %v1083 = vmul.f32 %v1082, %v1051
    %v1084 = vmul.f32 %v1083, %v1082
    %v1085 = vmul.f32 0.5, %v1084
    %v1086 = vsub.f32 1.5, %v1085
    %v1087 = vmul.f32 %v1082, %v1086
    %vm1088 = vweird.f32 %v1051
    %vm1089 = vweird.f32 %v1082
    %vm1090 = vmor %vm1088, %vm1089
    %v1091 = vsel %vm1090, %v1082, %v1087
    %v1092 = vmul.f32 %v1024, %v1061
    %v1093 = vmul.f32 %v1025, %v1071
    %v1094 = vmul.f32 %v1026, %v1081
    %v1095 = vmul.f32 %v1027, %v1091
    %s1096 = scalar_lea.vmem %s5, 64
    %v1097 = vld [vmem:[%s1096] sm:$0xff]
    %v1098 = vld [vmem:[%s1096 + $0x8] sm:$0xff]
    %v1099 = vld [vmem:[%s1096 + $0x10] sm:$0xff]
    %v1100 = vld [vmem:[%s1096 + $0x18] sm:$0xff]
    %v1102 = vsel %vm119, %v1092, 0
    %v1105 = vsel %vm119, %v1093, 0
    %v1108 = vsel %vm119, %v1094, 0
    %v1111 = vsel %vm119, %v1095, 0
    %1113 = vmatpush.msra.mxu0 0.0
    %1114 = vmatpush.msra.mxu0 0.0
    %1115 = vmatpush.msra.mxu0 0.0
    %1116 = vmatpush.msra.mxu0 0.0
    %1117 = vmatpush.msra.mxu0 0.0
    %1118 = vmatpush.msra.mxu0 0.0
    %1119 = vmatpush.msra.mxu0 0.0
    %1120 = vmatpush.msra.mxu0 0.0
    %1121 = vmatpush.msra.mxu0 0.0
    %1122 = vmatpush.msra.mxu0 0.0
    %1123 = vmatpush.msra.mxu0 0.0
    %1124 = vmatpush.msra.mxu0 0.0
    %1125 = vmatpush.msra.mxu0 %v1100
    %1126 = vmatpush.msra.mxu0 %v1099
    %1127 = vmatpush.msra.mxu0 %v1098
    %1128 = vmatpush.msra.mxu0 %v1097
    %1129 = vmatmul.f32.gmra.mxu0 %v1102
    %v1130 = vpop.f32.mrf.mxu0
    %v1131 = vadd.f32 0.0, %v1130
    %1132 = vmatmul.f32.gmra.mxu0 %v1105
    %v1133 = vpop.f32.mrf.mxu0
    %v1134 = vadd.f32 0.0, %v1133
    %1135 = vmatmul.f32.gmra.mxu0 %v1108
    %v1136 = vpop.f32.mrf.mxu0
    %v1137 = vadd.f32 0.0, %v1136
    %1138 = vmatmul.f32.gmra.mxu0 %v1111
    %v1139 = vpop.f32.mrf.mxu0
    %v1140 = vadd.f32 0.0, %v1139
    %1141 = vdwg.mxu0
    %v1142 = vmul.f32 %v1131, 0.25
    %v1143 = vmul.f32 %v1134, 0.25
    %v1144 = vmul.f32 %v1137, 0.25
    %v1145 = vmul.f32 %v1140, 0.25
    %v1146 = vsel %vm119, %v1142, -inf
    %1147 = vmax.xlane.f32.xlu0 %v1146
    %v1148 = vpop.xlane.xlu0 %1147
    %v1149 = vsel %vm119, %v1143, -inf
    %1150 = vmax.xlane.f32.xlu0 %v1149
    %v1151 = vpop.xlane.xlu0 %1150
    %v1152 = vsel %vm119, %v1144, -inf
    %1153 = vmax.xlane.f32.xlu0 %v1152
    %v1154 = vpop.xlane.xlu0 %1153
    %v1155 = vsel %vm119, %v1145, -inf
    %1156 = vmax.xlane.f32.xlu0 %v1155
    %v1157 = vpop.xlane.xlu0 %1156
    %v1158 = vsub.f32 %v1142, %v1148
    %v1159 = vsub.f32 %v1143, %v1151
    %v1160 = vsub.f32 %v1144, %v1154
    %v1161 = vsub.f32 %v1145, %v1157
    %v1162 = vmul.f32 %v1158, 1.442695
    %v1163 = vpow.pop %v1162
    %v1164 = vmul.f32 %v1159, 1.442695
    %v1165 = vpow.pop %v1164
    %v1166 = vmul.f32 %v1160, 1.442695
    %v1167 = vpow.pop %v1166
    %v1168 = vmul.f32 %v1161, 1.442695
    %v1169 = vpow.pop %v1168
    %v1171 = vsel %vm119, %v1163, 0
    %v1174 = vsel %vm119, %v1165, 0
    %v1177 = vsel %vm119, %v1167, 0
    %v1180 = vsel %vm119, %v1169, 0
    %1182 = vmatpush.msra.mxu0 0.0
    %1183 = vmatpush.msra.mxu0 0.0
    %1184 = vmatpush.msra.mxu0 0.0
    %1185 = vmatpush.msra.mxu0 0.0
    %1186 = vmatpush.msra.mxu0 0.0
    %1187 = vmatpush.msra.mxu0 0.0
    %1188 = vmatpush.msra.mxu0 0.0
    %1189 = vmatpush.msra.mxu0 0.0
    %1190 = vmatpush.msra.mxu0 0.0
    %1191 = vmatpush.msra.mxu0 0.0
    %1192 = vmatpush.msra.mxu0 0.0
    %1193 = vmatpush.msra.mxu0 0.0
    %1194 = vmatpush.msra.mxu0 %v114
    %1195 = vmatpush.msra.mxu0 %v113
    %1196 = vmatpush.msra.mxu0 %v112
    %1197 = vmatpush.msra.mxu0 %v111
    %1198 = vmatmul.f32.gmra.mxu0 %v1171
    %v1199 = vpop.f32.mrf.mxu0
    %v1200 = vadd.f32 0.0, %v1199
    %1201 = vmatmul.f32.gmra.mxu0 %v1174
    %v1202 = vpop.f32.mrf.mxu0
    %v1203 = vadd.f32 0.0, %v1202
    %1204 = vmatmul.f32.gmra.mxu0 %v1177
    %v1205 = vpop.f32.mrf.mxu0
    %v1206 = vadd.f32 0.0, %v1205
    %1207 = vmatmul.f32.gmra.mxu0 %v1180
    %v1208 = vpop.f32.mrf.mxu0
    %v1209 = vadd.f32 0.0, %v1208
    %1210 = vdwg.mxu0
    %v1211 = vrcp.pop %v1200
    %v1212 = vrcp.pop %v1203
    %v1213 = vrcp.pop %v1206
    %v1214 = vrcp.pop %v1209
    %v1215 = vmul.f32 %v1163, %v1211
    %v1216 = vmul.f32 %v1165, %v1212
    %v1217 = vmul.f32 %v1167, %v1213
    %v1218 = vmul.f32 %v1169, %v1214
    %s1219 = scalar_lea.vmem %s6, 64
    %v1220 = vld [vmem:[%s1219] sm:$0xff]
    %v1221 = vld [vmem:[%s1219 + $0x8] sm:$0xff]
    %v1222 = vld [vmem:[%s1219 + $0x10] sm:$0xff]
    %v1223 = vld [vmem:[%s1219 + $0x18] sm:$0xff]
    %v1225 = vsel %vm119, %v1215, 0
    %v1228 = vsel %vm119, %v1216, 0
    %v1231 = vsel %vm119, %v1217, 0
    %v1234 = vsel %vm119, %v1218, 0
    %1236 = vmatpush.msra.mxu0 0.0
    %1237 = vmatpush.msra.mxu0 0.0
    %1238 = vmatpush.msra.mxu0 0.0
    %1239 = vmatpush.msra.mxu0 0.0
    %1240 = vmatpush.msra.mxu0 0.0
    %1241 = vmatpush.msra.mxu0 0.0
    %1242 = vmatpush.msra.mxu0 0.0
    %1243 = vmatpush.msra.mxu0 0.0
    %1244 = vmatpush.msra.mxu0 0.0
    %1245 = vmatpush.msra.mxu0 0.0
    %1246 = vmatpush.msra.mxu0 0.0
    %1247 = vmatpush.msra.mxu0 0.0
    %1248 = vmatpush.msra.mxu0 %v1223
    %1249 = vmatpush.msra.mxu0 %v1222
    %1250 = vmatpush.msra.mxu0 %v1221
    %1251 = vmatpush.msra.mxu0 %v1220
    %1252 = vmatmul.f32.gmra.mxu0 %v1225
    %v1253 = vpop.f32.mrf.mxu0
    %v1254 = vadd.f32 0.0, %v1253
    %1255 = vmatmul.f32.gmra.mxu0 %v1228
    %v1256 = vpop.f32.mrf.mxu0
    %v1257 = vadd.f32 0.0, %v1256
    %1258 = vmatmul.f32.gmra.mxu0 %v1231
    %v1259 = vpop.f32.mrf.mxu0
    %v1260 = vadd.f32 0.0, %v1259
    %1261 = vmatmul.f32.gmra.mxu0 %v1234
    %v1262 = vpop.f32.mrf.mxu0
    %v1263 = vadd.f32 0.0, %v1262
    %1264 = vdwg.mxu0
    %v1265 = vadd.f32 %v1024, %v1254
    %v1266 = vadd.f32 %v1025, %v1257
    %v1267 = vadd.f32 %v1026, %v1260
    %v1268 = vadd.f32 %v1027, %v1263
    %v1269 = vmul.f32 %v1265, %v1265
    %v1270 = vmul.f32 %v1266, %v1266
    %v1271 = vmul.f32 %v1267, %v1267
    %v1272 = vmul.f32 %v1268, %v1268
    %v1273 = vsel %vm119, %v1269, 0.0
    %1274 = vadd.xlane.f32.xlu0 %v1273
    %v1275 = vpop.xlane.xlu0 %1274
    %v1276 = vsel %vm119, %v1270, 0.0
    %1277 = vadd.xlane.f32.xlu0 %v1276
    %v1278 = vpop.xlane.xlu0 %1277
    %v1279 = vsel %vm119, %v1271, 0.0
    %1280 = vadd.xlane.f32.xlu0 %v1279
    %v1281 = vpop.xlane.xlu0 %1280
    %v1282 = vsel %vm119, %v1272, 0.0
    %1283 = vadd.xlane.f32.xlu0 %v1282
    %v1284 = vpop.xlane.xlu0 %1283
    %v1285 = vmul.f32 %v1275, %v138
    %v1286 = vmul.f32 %v1278, %v138
    %v1287 = vmul.f32 %v1281, %v138
    %v1288 = vmul.f32 %v1284, %v138
    %v1289 = vrsqrt.pop %v1285
    %v1290 = vmul.f32 %v1289, %v1285
    %v1291 = vmul.f32 %v1290, %v1289
    %v1292 = vmul.f32 0.5, %v1291
    %v1293 = vsub.f32 1.5, %v1292
    %v1294 = vmul.f32 %v1289, %v1293
    %vm1295 = vweird.f32 %v1285
    %vm1296 = vweird.f32 %v1289
    %vm1297 = vmor %vm1295, %vm1296
    %v1298 = vsel %vm1297, %v1289, %v1294
    %v1299 = vrsqrt.pop %v1286
    %v1300 = vmul.f32 %v1299, %v1286
    %v1301 = vmul.f32 %v1300, %v1299
    %v1302 = vmul.f32 0.5, %v1301
    %v1303 = vsub.f32 1.5, %v1302
    %v1304 = vmul.f32 %v1299, %v1303
    %vm1305 = vweird.f32 %v1286
    %vm1306 = vweird.f32 %v1299
    %vm1307 = vmor %vm1305, %vm1306
    %v1308 = vsel %vm1307, %v1299, %v1304
    %v1309 = vrsqrt.pop %v1287
    %v1310 = vmul.f32 %v1309, %v1287
    %v1311 = vmul.f32 %v1310, %v1309
    %v1312 = vmul.f32 0.5, %v1311
    %v1313 = vsub.f32 1.5, %v1312
    %v1314 = vmul.f32 %v1309, %v1313
    %vm1315 = vweird.f32 %v1287
    %vm1316 = vweird.f32 %v1309
    %vm1317 = vmor %vm1315, %vm1316
    %v1318 = vsel %vm1317, %v1309, %v1314
    %v1319 = vrsqrt.pop %v1288
    %v1320 = vmul.f32 %v1319, %v1288
    %v1321 = vmul.f32 %v1320, %v1319
    %v1322 = vmul.f32 0.5, %v1321
    %v1323 = vsub.f32 1.5, %v1322
    %v1324 = vmul.f32 %v1319, %v1323
    %vm1325 = vweird.f32 %v1288
    %vm1326 = vweird.f32 %v1319
    %vm1327 = vmor %vm1325, %vm1326
    %v1328 = vsel %vm1327, %v1319, %v1324
    %v1329 = vmul.f32 %v1265, %v1298
    %v1330 = vmul.f32 %v1266, %v1308
    %v1331 = vmul.f32 %v1267, %v1318
    %v1332 = vmul.f32 %v1268, %v1328
    %s1333 = scalar_lea.vmem %s7, 64
    %v1334 = vld [vmem:[%s1333] sm:$0xff]
    %v1335 = vld [vmem:[%s1333 + $0x8] sm:$0xff]
    %v1336 = vld [vmem:[%s1333 + $0x10] sm:$0xff]
    %v1337 = vld [vmem:[%s1333 + $0x18] sm:$0xff]
    %s1338 = scalar_lea.vmem %s8, 2
    %v1339 = vld [vmem:[%s1338] sm:$0x1]
    %v1341 = vperm.slane %v1339, 0
    %v1344 = vsel %vm119, %v1329, 0
    %v1347 = vsel %vm119, %v1330, 0
    %v1350 = vsel %vm119, %v1331, 0
    %v1353 = vsel %vm119, %v1332, 0
    %1355 = vmatpush.msra.mxu0 0.0
    %1356 = vmatpush.msra.mxu0 0.0
    %1357 = vmatpush.msra.mxu0 0.0
    %1358 = vmatpush.msra.mxu0 0.0
    %1359 = vmatpush.msra.mxu0 0.0
    %1360 = vmatpush.msra.mxu0 0.0
    %1361 = vmatpush.msra.mxu0 0.0
    %1362 = vmatpush.msra.mxu0 0.0
    %1363 = vmatpush.msra.mxu0 0.0
    %1364 = vmatpush.msra.mxu0 0.0
    %1365 = vmatpush.msra.mxu0 0.0
    %1366 = vmatpush.msra.mxu0 0.0
    %1367 = vmatpush.msra.mxu0 %v1337
    %1368 = vmatpush.msra.mxu0 %v1336
    %1369 = vmatpush.msra.mxu0 %v1335
    %1370 = vmatpush.msra.mxu0 %v1334
    %1371 = vmatmul.f32.gmra.mxu0 %v1344
    %v1372 = vpop.f32.mrf.mxu0
    %v1373 = vadd.f32 %v1341, %v1372
    %1374 = vmatmul.f32.gmra.mxu0 %v1347
    %v1375 = vpop.f32.mrf.mxu0
    %v1376 = vadd.f32 %v1341, %v1375
    %1377 = vmatmul.f32.gmra.mxu0 %v1350
    %v1378 = vpop.f32.mrf.mxu0
    %v1379 = vadd.f32 %v1341, %v1378
    %1380 = vmatmul.f32.gmra.mxu0 %v1353
    %v1381 = vpop.f32.mrf.mxu0
    %v1382 = vadd.f32 %v1341, %v1381
    %1383 = vdwg.mxu0
    %v1384 = vmul.f32 %v1373, 0.5
    %v1385 = vmul.f32 %v1376, 0.5
    %v1386 = vmul.f32 %v1379, 0.5
    %v1387 = vmul.f32 %v1382, 0.5
    %v1388 = vtanh.pop %v1384
    %v1389 = vtanh.pop %v1385
    %v1390 = vtanh.pop %v1386
    %v1391 = vtanh.pop %v1387
    %v1392 = vadd.f32 %v1388, 1.0
    %v1393 = vadd.f32 %v1389, 1.0
    %v1394 = vadd.f32 %v1390, 1.0
    %v1395 = vadd.f32 %v1391, 1.0
    %v1396 = vmul.f32 %v1392, 0.5
    %v1397 = vmul.f32 %v1393, 0.5
    %v1398 = vmul.f32 %v1394, 0.5
    %v1399 = vmul.f32 %v1395, 0.5
    %v1400 = vmul.f32 %v1373, %v1396
    %v1401 = vmul.f32 %v1376, %v1397
    %v1402 = vmul.f32 %v1379, %v1398
    %v1403 = vmul.f32 %v1382, %v1399
    %s1404 = scalar_lea.vmem %s9, 192
    %v1405 = vld [vmem:[%s1404] sm:$0xff]
    %v1406 = vld [vmem:[%s1404 + $0x8] sm:$0xff]
    %v1407 = vld [vmem:[%s1404 + $0x10] sm:$0xff]
    %v1408 = vld [vmem:[%s1404 + $0x18] sm:$0xff]
    %v1409 = vld [vmem:[%s1404 + $0x20] sm:$0xff]
    %v1410 = vld [vmem:[%s1404 + $0x28] sm:$0xff]
    %v1411 = vld [vmem:[%s1404 + $0x30] sm:$0xff]
    %v1412 = vld [vmem:[%s1404 + $0x38] sm:$0xff]
    %v1413 = vld [vmem:[%s1404 + $0x40] sm:$0xff]
    %v1414 = vld [vmem:[%s1404 + $0x48] sm:$0xff]
    %v1415 = vld [vmem:[%s1404 + $0x50] sm:$0xff]
    %v1416 = vld [vmem:[%s1404 + $0x58] sm:$0xff]
    %s1417 = scalar_lea.vmem %s10, 2
    %v1418 = vld [vmem:[%s1417] sm:$0x1]
    %v1420 = vperm.slane %v1418, 0
    %v1423 = vsel %vm507, %v1400, 0
    %v1426 = vsel %vm507, %v1401, 0
    %v1429 = vsel %vm507, %v1402, 0
    %v1432 = vsel %vm507, %v1403, 0
    %1434 = vmatpush.msra.mxu0 0.0
    %1435 = vmatpush.msra.mxu0 0.0
    %1436 = vmatpush.msra.mxu0 0.0
    %1437 = vmatpush.msra.mxu0 0.0
    %1438 = vmatpush.msra.mxu0 %v1416
    %1439 = vmatpush.msra.mxu0 %v1415
    %1440 = vmatpush.msra.mxu0 %v1414
    %1441 = vmatpush.msra.mxu0 %v1413
    %1442 = vmatpush.msra.mxu0 %v1412
    %1443 = vmatpush.msra.mxu0 %v1411
    %1444 = vmatpush.msra.mxu0 %v1410
    %1445 = vmatpush.msra.mxu0 %v1409
    %1446 = vmatpush.msra.mxu0 %v1408
    %1447 = vmatpush.msra.mxu0 %v1407
    %1448 = vmatpush.msra.mxu0 %v1406
    %1449 = vmatpush.msra.mxu0 %v1405
    %1450 = vmatmul.f32.gmra.mxu0 %v1423
    %v1451 = vpop.f32.mrf.mxu0
    %v1452 = vadd.f32 %v1420, %v1451
    %1453 = vmatmul.f32.gmra.mxu0 %v1426
    %v1454 = vpop.f32.mrf.mxu0
    %v1455 = vadd.f32 %v1420, %v1454
    %1456 = vmatmul.f32.gmra.mxu0 %v1429
    %v1457 = vpop.f32.mrf.mxu0
    %v1458 = vadd.f32 %v1420, %v1457
    %1459 = vmatmul.f32.gmra.mxu0 %v1432
    %v1460 = vpop.f32.mrf.mxu0
    %v1461 = vadd.f32 %v1420, %v1460
    %1462 = vdwg.mxu0
    %v1463 = vmul.f32 %v1452, 0.5
    %v1464 = vmul.f32 %v1455, 0.5
    %v1465 = vmul.f32 %v1458, 0.5
    %v1466 = vmul.f32 %v1461, 0.5
    %v1467 = vtanh.pop %v1463
    %v1468 = vtanh.pop %v1464
    %v1469 = vtanh.pop %v1465
    %v1470 = vtanh.pop %v1466
    %v1471 = vadd.f32 %v1467, 1.0
    %v1472 = vadd.f32 %v1468, 1.0
    %v1473 = vadd.f32 %v1469, 1.0
    %v1474 = vadd.f32 %v1470, 1.0
    %v1475 = vmul.f32 %v1471, 0.5
    %v1476 = vmul.f32 %v1472, 0.5
    %v1477 = vmul.f32 %v1473, 0.5
    %v1478 = vmul.f32 %v1474, 0.5
    %v1479 = vmul.f32 %v1452, %v1475
    %v1480 = vmul.f32 %v1455, %v1476
    %v1481 = vmul.f32 %v1458, %v1477
    %v1482 = vmul.f32 %v1461, %v1478
    %v1483 = vadd.f32 %v1265, %v1479
    %v1484 = vadd.f32 %v1266, %v1480
    %v1485 = vadd.f32 %v1267, %v1481
    %v1486 = vadd.f32 %v1268, %v1482
    %v1487 = vmul.f32 %v1483, %v1483
    %v1488 = vmul.f32 %v1484, %v1484
    %v1489 = vmul.f32 %v1485, %v1485
    %v1490 = vmul.f32 %v1486, %v1486
    %v1491 = vsel %vm119, %v1487, 0.0
    %1492 = vadd.xlane.f32.xlu0 %v1491
    %v1493 = vpop.xlane.xlu0 %1492
    %v1494 = vsel %vm119, %v1488, 0.0
    %1495 = vadd.xlane.f32.xlu0 %v1494
    %v1496 = vpop.xlane.xlu0 %1495
    %v1497 = vsel %vm119, %v1489, 0.0
    %1498 = vadd.xlane.f32.xlu0 %v1497
    %v1499 = vpop.xlane.xlu0 %1498
    %v1500 = vsel %vm119, %v1490, 0.0
    %1501 = vadd.xlane.f32.xlu0 %v1500
    %v1502 = vpop.xlane.xlu0 %1501
    %v1503 = vmul.f32 %v1493, %v138
    %v1504 = vmul.f32 %v1496, %v138
    %v1505 = vmul.f32 %v1499, %v138
    %v1506 = vmul.f32 %v1502, %v138
    %v1507 = vrsqrt.pop %v1503
    %v1508 = vmul.f32 %v1507, %v1503
    %v1509 = vmul.f32 %v1508, %v1507
    %v1510 = vmul.f32 0.5, %v1509
    %v1511 = vsub.f32 1.5, %v1510
    %v1512 = vmul.f32 %v1507, %v1511
    %vm1513 = vweird.f32 %v1503
    %vm1514 = vweird.f32 %v1507
    %vm1515 = vmor %vm1513, %vm1514
    %v1516 = vsel %vm1515, %v1507, %v1512
    %v1517 = vrsqrt.pop %v1504
    %v1518 = vmul.f32 %v1517, %v1504
    %v1519 = vmul.f32 %v1518, %v1517
    %v1520 = vmul.f32 0.5, %v1519
    %v1521 = vsub.f32 1.5, %v1520
    %v1522 = vmul.f32 %v1517, %v1521
    %vm1523 = vweird.f32 %v1504
    %vm1524 = vweird.f32 %v1517
    %vm1525 = vmor %vm1523, %vm1524
    %v1526 = vsel %vm1525, %v1517, %v1522
    %v1527 = vrsqrt.pop %v1505
    %v1528 = vmul.f32 %v1527, %v1505
    %v1529 = vmul.f32 %v1528, %v1527
    %v1530 = vmul.f32 0.5, %v1529
    %v1531 = vsub.f32 1.5, %v1530
    %v1532 = vmul.f32 %v1527, %v1531
    %vm1533 = vweird.f32 %v1505
    %vm1534 = vweird.f32 %v1527
    %vm1535 = vmor %vm1533, %vm1534
    %v1536 = vsel %vm1535, %v1527, %v1532
    %v1537 = vrsqrt.pop %v1506
    %v1538 = vmul.f32 %v1537, %v1506
    %v1539 = vmul.f32 %v1538, %v1537
    %v1540 = vmul.f32 0.5, %v1539
    %v1541 = vsub.f32 1.5, %v1540
    %v1542 = vmul.f32 %v1537, %v1541
    %vm1543 = vweird.f32 %v1506
    %vm1544 = vweird.f32 %v1537
    %vm1545 = vmor %vm1543, %vm1544
    %v1546 = vsel %vm1545, %v1537, %v1542
    %v1547 = vmul.f32 %v1483, %v1516
    %v1548 = vmul.f32 %v1484, %v1526
    %v1549 = vmul.f32 %v1485, %v1536
    %v1550 = vmul.f32 %v1486, %v1546
    %s1551 = scalar_lea.vmem %s5, 96
    %v1552 = vld [vmem:[%s1551] sm:$0xff]
    %v1553 = vld [vmem:[%s1551 + $0x8] sm:$0xff]
    %v1554 = vld [vmem:[%s1551 + $0x10] sm:$0xff]
    %v1555 = vld [vmem:[%s1551 + $0x18] sm:$0xff]
    %v1557 = vsel %vm119, %v1547, 0
    %v1560 = vsel %vm119, %v1548, 0
    %v1563 = vsel %vm119, %v1549, 0
    %v1566 = vsel %vm119, %v1550, 0
    %1568 = vmatpush.msra.mxu0 0.0
    %1569 = vmatpush.msra.mxu0 0.0
    %1570 = vmatpush.msra.mxu0 0.0
    %1571 = vmatpush.msra.mxu0 0.0
    %1572 = vmatpush.msra.mxu0 0.0
    %1573 = vmatpush.msra.mxu0 0.0
    %1574 = vmatpush.msra.mxu0 0.0
    %1575 = vmatpush.msra.mxu0 0.0
    %1576 = vmatpush.msra.mxu0 0.0
    %1577 = vmatpush.msra.mxu0 0.0
    %1578 = vmatpush.msra.mxu0 0.0
    %1579 = vmatpush.msra.mxu0 0.0
    %1580 = vmatpush.msra.mxu0 %v1555
    %1581 = vmatpush.msra.mxu0 %v1554
    %1582 = vmatpush.msra.mxu0 %v1553
    %1583 = vmatpush.msra.mxu0 %v1552
    %1584 = vmatmul.f32.gmra.mxu0 %v1557
    %v1585 = vpop.f32.mrf.mxu0
    %v1586 = vadd.f32 0.0, %v1585
    %1587 = vmatmul.f32.gmra.mxu0 %v1560
    %v1588 = vpop.f32.mrf.mxu0
    %v1589 = vadd.f32 0.0, %v1588
    %1590 = vmatmul.f32.gmra.mxu0 %v1563
    %v1591 = vpop.f32.mrf.mxu0
    %v1592 = vadd.f32 0.0, %v1591
    %1593 = vmatmul.f32.gmra.mxu0 %v1566
    %v1594 = vpop.f32.mrf.mxu0
    %v1595 = vadd.f32 0.0, %v1594
    %1596 = vdwg.mxu0
    %v1597 = vmul.f32 %v1586, 0.25
    %v1598 = vmul.f32 %v1589, 0.25
    %v1599 = vmul.f32 %v1592, 0.25
    %v1600 = vmul.f32 %v1595, 0.25
    %v1601 = vsel %vm119, %v1597, -inf
    %1602 = vmax.xlane.f32.xlu0 %v1601
    %v1603 = vpop.xlane.xlu0 %1602
    %v1604 = vsel %vm119, %v1598, -inf
    %1605 = vmax.xlane.f32.xlu0 %v1604
    %v1606 = vpop.xlane.xlu0 %1605
    %v1607 = vsel %vm119, %v1599, -inf
    %1608 = vmax.xlane.f32.xlu0 %v1607
    %v1609 = vpop.xlane.xlu0 %1608
    %v1610 = vsel %vm119, %v1600, -inf
    %1611 = vmax.xlane.f32.xlu0 %v1610
    %v1612 = vpop.xlane.xlu0 %1611
    %v1613 = vsub.f32 %v1597, %v1603
    %v1614 = vsub.f32 %v1598, %v1606
    %v1615 = vsub.f32 %v1599, %v1609
    %v1616 = vsub.f32 %v1600, %v1612
    %v1617 = vmul.f32 %v1613, 1.442695
    %v1618 = vpow.pop %v1617
    %v1619 = vmul.f32 %v1614, 1.442695
    %v1620 = vpow.pop %v1619
    %v1621 = vmul.f32 %v1615, 1.442695
    %v1622 = vpow.pop %v1621
    %v1623 = vmul.f32 %v1616, 1.442695
    %v1624 = vpow.pop %v1623
    %v1626 = vsel %vm119, %v1618, 0
    %v1629 = vsel %vm119, %v1620, 0
    %v1632 = vsel %vm119, %v1622, 0
    %v1635 = vsel %vm119, %v1624, 0
    %1637 = vmatpush.msra.mxu0 0.0
    %1638 = vmatpush.msra.mxu0 0.0
    %1639 = vmatpush.msra.mxu0 0.0
    %1640 = vmatpush.msra.mxu0 0.0
    %1641 = vmatpush.msra.mxu0 0.0
    %1642 = vmatpush.msra.mxu0 0.0
    %1643 = vmatpush.msra.mxu0 0.0
    %1644 = vmatpush.msra.mxu0 0.0
    %1645 = vmatpush.msra.mxu0 0.0
    %1646 = vmatpush.msra.mxu0 0.0
    %1647 = vmatpush.msra.mxu0 0.0
    %1648 = vmatpush.msra.mxu0 0.0
    %1649 = vmatpush.msra.mxu0 %v114
    %1650 = vmatpush.msra.mxu0 %v113
    %1651 = vmatpush.msra.mxu0 %v112
    %1652 = vmatpush.msra.mxu0 %v111
    %1653 = vmatmul.f32.gmra.mxu0 %v1626
    %v1654 = vpop.f32.mrf.mxu0
    %v1655 = vadd.f32 0.0, %v1654
    %1656 = vmatmul.f32.gmra.mxu0 %v1629
    %v1657 = vpop.f32.mrf.mxu0
    %v1658 = vadd.f32 0.0, %v1657
    %1659 = vmatmul.f32.gmra.mxu0 %v1632
    %v1660 = vpop.f32.mrf.mxu0
    %v1661 = vadd.f32 0.0, %v1660
    %1662 = vmatmul.f32.gmra.mxu0 %v1635
    %v1663 = vpop.f32.mrf.mxu0
    %v1664 = vadd.f32 0.0, %v1663
    %1665 = vdwg.mxu0
    %v1666 = vrcp.pop %v1655
    %v1667 = vrcp.pop %v1658
    %v1668 = vrcp.pop %v1661
    %v1669 = vrcp.pop %v1664
    %v1670 = vmul.f32 %v1618, %v1666
    %v1671 = vmul.f32 %v1620, %v1667
    %v1672 = vmul.f32 %v1622, %v1668
    %v1673 = vmul.f32 %v1624, %v1669
    %s1674 = scalar_lea.vmem %s6, 96
    %v1675 = vld [vmem:[%s1674] sm:$0xff]
    %v1676 = vld [vmem:[%s1674 + $0x8] sm:$0xff]
    %v1677 = vld [vmem:[%s1674 + $0x10] sm:$0xff]
    %v1678 = vld [vmem:[%s1674 + $0x18] sm:$0xff]
    %v1680 = vsel %vm119, %v1670, 0
    %v1683 = vsel %vm119, %v1671, 0
    %v1686 = vsel %vm119, %v1672, 0
    %v1689 = vsel %vm119, %v1673, 0
    %1691 = vmatpush.msra.mxu0 0.0
    %1692 = vmatpush.msra.mxu0 0.0
    %1693 = vmatpush.msra.mxu0 0.0
    %1694 = vmatpush.msra.mxu0 0.0
    %1695 = vmatpush.msra.mxu0 0.0
    %1696 = vmatpush.msra.mxu0 0.0
    %1697 = vmatpush.msra.mxu0 0.0
    %1698 = vmatpush.msra.mxu0 0.0
    %1699 = vmatpush.msra.mxu0 0.0
    %1700 = vmatpush.msra.mxu0 0.0
    %1701 = vmatpush.msra.mxu0 0.0
    %1702 = vmatpush.msra.mxu0 0.0
    %1703 = vmatpush.msra.mxu0 %v1678
    %1704 = vmatpush.msra.mxu0 %v1677
    %1705 = vmatpush.msra.mxu0 %v1676
    %1706 = vmatpush.msra.mxu0 %v1675
    %1707 = vmatmul.f32.gmra.mxu0 %v1680
    %v1708 = vpop.f32.mrf.mxu0
    %v1709 = vadd.f32 0.0, %v1708
    %1710 = vmatmul.f32.gmra.mxu0 %v1683
    %v1711 = vpop.f32.mrf.mxu0
    %v1712 = vadd.f32 0.0, %v1711
    %1713 = vmatmul.f32.gmra.mxu0 %v1686
    %v1714 = vpop.f32.mrf.mxu0
    %v1715 = vadd.f32 0.0, %v1714
    %1716 = vmatmul.f32.gmra.mxu0 %v1689
    %v1717 = vpop.f32.mrf.mxu0
    %v1718 = vadd.f32 0.0, %v1717
    %1719 = vdwg.mxu0
    %v1720 = vadd.f32 %v1483, %v1709
    %v1721 = vadd.f32 %v1484, %v1712
    %v1722 = vadd.f32 %v1485, %v1715
    %v1723 = vadd.f32 %v1486, %v1718
    %v1724 = vmul.f32 %v1720, %v1720
    %v1725 = vmul.f32 %v1721, %v1721
    %v1726 = vmul.f32 %v1722, %v1722
    %v1727 = vmul.f32 %v1723, %v1723
    %v1728 = vsel %vm119, %v1724, 0.0
    %1729 = vadd.xlane.f32.xlu0 %v1728
    %v1730 = vpop.xlane.xlu0 %1729
    %v1731 = vsel %vm119, %v1725, 0.0
    %1732 = vadd.xlane.f32.xlu0 %v1731
    %v1733 = vpop.xlane.xlu0 %1732
    %v1734 = vsel %vm119, %v1726, 0.0
    %1735 = vadd.xlane.f32.xlu0 %v1734
    %v1736 = vpop.xlane.xlu0 %1735
    %v1737 = vsel %vm119, %v1727, 0.0
    %1738 = vadd.xlane.f32.xlu0 %v1737
    %v1739 = vpop.xlane.xlu0 %1738
    %v1740 = vmul.f32 %v1730, %v138
    %v1741 = vmul.f32 %v1733, %v138
    %v1742 = vmul.f32 %v1736, %v138
    %v1743 = vmul.f32 %v1739, %v138
    %v1744 = vrsqrt.pop %v1740
    %v1745 = vmul.f32 %v1744, %v1740
    %v1746 = vmul.f32 %v1745, %v1744
    %v1747 = vmul.f32 0.5, %v1746
    %v1748 = vsub.f32 1.5, %v1747
    %v1749 = vmul.f32 %v1744, %v1748
    %vm1750 = vweird.f32 %v1740
    %vm1751 = vweird.f32 %v1744
    %vm1752 = vmor %vm1750, %vm1751
    %v1753 = vsel %vm1752, %v1744, %v1749
    %v1754 = vrsqrt.pop %v1741
    %v1755 = vmul.f32 %v1754, %v1741
    %v1756 = vmul.f32 %v1755, %v1754
    %v1757 = vmul.f32 0.5, %v1756
    %v1758 = vsub.f32 1.5, %v1757
    %v1759 = vmul.f32 %v1754, %v1758
    %vm1760 = vweird.f32 %v1741
    %vm1761 = vweird.f32 %v1754
    %vm1762 = vmor %vm1760, %vm1761
    %v1763 = vsel %vm1762, %v1754, %v1759
    %v1764 = vrsqrt.pop %v1742
    %v1765 = vmul.f32 %v1764, %v1742
    %v1766 = vmul.f32 %v1765, %v1764
    %v1767 = vmul.f32 0.5, %v1766
    %v1768 = vsub.f32 1.5, %v1767
    %v1769 = vmul.f32 %v1764, %v1768
    %vm1770 = vweird.f32 %v1742
    %vm1771 = vweird.f32 %v1764
    %vm1772 = vmor %vm1770, %vm1771
    %v1773 = vsel %vm1772, %v1764, %v1769
    %v1774 = vrsqrt.pop %v1743
    %v1775 = vmul.f32 %v1774, %v1743
    %v1776 = vmul.f32 %v1775, %v1774
    %v1777 = vmul.f32 0.5, %v1776
    %v1778 = vsub.f32 1.5, %v1777
    %v1779 = vmul.f32 %v1774, %v1778
    %vm1780 = vweird.f32 %v1743
    %vm1781 = vweird.f32 %v1774
    %vm1782 = vmor %vm1780, %vm1781
    %v1783 = vsel %vm1782, %v1774, %v1779
    %v1784 = vmul.f32 %v1720, %v1753
    %v1785 = vmul.f32 %v1721, %v1763
    %v1786 = vmul.f32 %v1722, %v1773
    %v1787 = vmul.f32 %v1723, %v1783
    %s1788 = scalar_lea.vmem %s7, 96
    %v1789 = vld [vmem:[%s1788] sm:$0xff]
    %v1790 = vld [vmem:[%s1788 + $0x8] sm:$0xff]
    %v1791 = vld [vmem:[%s1788 + $0x10] sm:$0xff]
    %v1792 = vld [vmem:[%s1788 + $0x18] sm:$0xff]
    %s1793 = scalar_lea.vmem %s8, 3
    %v1794 = vld [vmem:[%s1793] sm:$0x1]
    %v1796 = vperm.slane %v1794, 0
    %v1799 = vsel %vm119, %v1784, 0
    %v1802 = vsel %vm119, %v1785, 0
    %v1805 = vsel %vm119, %v1786, 0
    %v1808 = vsel %vm119, %v1787, 0
    %1810 = vmatpush.msra.mxu0 0.0
    %1811 = vmatpush.msra.mxu0 0.0
    %1812 = vmatpush.msra.mxu0 0.0
    %1813 = vmatpush.msra.mxu0 0.0
    %1814 = vmatpush.msra.mxu0 0.0
    %1815 = vmatpush.msra.mxu0 0.0
    %1816 = vmatpush.msra.mxu0 0.0
    %1817 = vmatpush.msra.mxu0 0.0
    %1818 = vmatpush.msra.mxu0 0.0
    %1819 = vmatpush.msra.mxu0 0.0
    %1820 = vmatpush.msra.mxu0 0.0
    %1821 = vmatpush.msra.mxu0 0.0
    %1822 = vmatpush.msra.mxu0 %v1792
    %1823 = vmatpush.msra.mxu0 %v1791
    %1824 = vmatpush.msra.mxu0 %v1790
    %1825 = vmatpush.msra.mxu0 %v1789
    %1826 = vmatmul.f32.gmra.mxu0 %v1799
    %v1827 = vpop.f32.mrf.mxu0
    %v1828 = vadd.f32 %v1796, %v1827
    %1829 = vmatmul.f32.gmra.mxu0 %v1802
    %v1830 = vpop.f32.mrf.mxu0
    %v1831 = vadd.f32 %v1796, %v1830
    %1832 = vmatmul.f32.gmra.mxu0 %v1805
    %v1833 = vpop.f32.mrf.mxu0
    %v1834 = vadd.f32 %v1796, %v1833
    %1835 = vmatmul.f32.gmra.mxu0 %v1808
    %v1836 = vpop.f32.mrf.mxu0
    %v1837 = vadd.f32 %v1796, %v1836
    %1838 = vdwg.mxu0
    %v1839 = vmul.f32 %v1828, 0.5
    %v1840 = vmul.f32 %v1831, 0.5
    %v1841 = vmul.f32 %v1834, 0.5
    %v1842 = vmul.f32 %v1837, 0.5
    %v1843 = vtanh.pop %v1839
    %v1844 = vtanh.pop %v1840
    %v1845 = vtanh.pop %v1841
    %v1846 = vtanh.pop %v1842
    %v1847 = vadd.f32 %v1843, 1.0
    %v1848 = vadd.f32 %v1844, 1.0
    %v1849 = vadd.f32 %v1845, 1.0
    %v1850 = vadd.f32 %v1846, 1.0
    %v1851 = vmul.f32 %v1847, 0.5
    %v1852 = vmul.f32 %v1848, 0.5
    %v1853 = vmul.f32 %v1849, 0.5
    %v1854 = vmul.f32 %v1850, 0.5
    %v1855 = vmul.f32 %v1828, %v1851
    %v1856 = vmul.f32 %v1831, %v1852
    %v1857 = vmul.f32 %v1834, %v1853
    %v1858 = vmul.f32 %v1837, %v1854
    %s1859 = scalar_lea.vmem %s9, 288
    %v1860 = vld [vmem:[%s1859] sm:$0xff]
    %v1861 = vld [vmem:[%s1859 + $0x8] sm:$0xff]
    %v1862 = vld [vmem:[%s1859 + $0x10] sm:$0xff]
    %v1863 = vld [vmem:[%s1859 + $0x18] sm:$0xff]
    %v1864 = vld [vmem:[%s1859 + $0x20] sm:$0xff]
    %v1865 = vld [vmem:[%s1859 + $0x28] sm:$0xff]
    %v1866 = vld [vmem:[%s1859 + $0x30] sm:$0xff]
    %v1867 = vld [vmem:[%s1859 + $0x38] sm:$0xff]
    %v1868 = vld [vmem:[%s1859 + $0x40] sm:$0xff]
    %v1869 = vld [vmem:[%s1859 + $0x48] sm:$0xff]
    %v1870 = vld [vmem:[%s1859 + $0x50] sm:$0xff]
    %v1871 = vld [vmem:[%s1859 + $0x58] sm:$0xff]
    %s1872 = scalar_lea.vmem %s10, 3
    %v1873 = vld [vmem:[%s1872] sm:$0x1]
    %v1875 = vperm.slane %v1873, 0
    %v1878 = vsel %vm507, %v1855, 0
    %v1881 = vsel %vm507, %v1856, 0
    %v1884 = vsel %vm507, %v1857, 0
    %v1887 = vsel %vm507, %v1858, 0
    %1889 = vmatpush.msra.mxu0 0.0
    %1890 = vmatpush.msra.mxu0 0.0
    %1891 = vmatpush.msra.mxu0 0.0
    %1892 = vmatpush.msra.mxu0 0.0
    %1893 = vmatpush.msra.mxu0 %v1871
    %1894 = vmatpush.msra.mxu0 %v1870
    %1895 = vmatpush.msra.mxu0 %v1869
    %1896 = vmatpush.msra.mxu0 %v1868
    %1897 = vmatpush.msra.mxu0 %v1867
    %1898 = vmatpush.msra.mxu0 %v1866
    %1899 = vmatpush.msra.mxu0 %v1865
    %1900 = vmatpush.msra.mxu0 %v1864
    %1901 = vmatpush.msra.mxu0 %v1863
    %1902 = vmatpush.msra.mxu0 %v1862
    %1903 = vmatpush.msra.mxu0 %v1861
    %1904 = vmatpush.msra.mxu0 %v1860
    %1905 = vmatmul.f32.gmra.mxu0 %v1878
    %v1906 = vpop.f32.mrf.mxu0
    %v1907 = vadd.f32 %v1875, %v1906
    %1908 = vmatmul.f32.gmra.mxu0 %v1881
    %v1909 = vpop.f32.mrf.mxu0
    %v1910 = vadd.f32 %v1875, %v1909
    %1911 = vmatmul.f32.gmra.mxu0 %v1884
    %v1912 = vpop.f32.mrf.mxu0
    %v1913 = vadd.f32 %v1875, %v1912
    %1914 = vmatmul.f32.gmra.mxu0 %v1887
    %v1915 = vpop.f32.mrf.mxu0
    %v1916 = vadd.f32 %v1875, %v1915
    %1917 = vdwg.mxu0
    %v1918 = vmul.f32 %v1907, 0.5
    %v1919 = vmul.f32 %v1910, 0.5
    %v1920 = vmul.f32 %v1913, 0.5
    %v1921 = vmul.f32 %v1916, 0.5
    %v1922 = vtanh.pop %v1918
    %v1923 = vtanh.pop %v1919
    %v1924 = vtanh.pop %v1920
    %v1925 = vtanh.pop %v1921
    %v1926 = vadd.f32 %v1922, 1.0
    %v1927 = vadd.f32 %v1923, 1.0
    %v1928 = vadd.f32 %v1924, 1.0
    %v1929 = vadd.f32 %v1925, 1.0
    %v1930 = vmul.f32 %v1926, 0.5
    %v1931 = vmul.f32 %v1927, 0.5
    %v1932 = vmul.f32 %v1928, 0.5
    %v1933 = vmul.f32 %v1929, 0.5
    %v1934 = vmul.f32 %v1907, %v1930
    %v1935 = vmul.f32 %v1910, %v1931
    %v1936 = vmul.f32 %v1913, %v1932
    %v1937 = vmul.f32 %v1916, %v1933
    %v1938 = vadd.f32 %v1720, %v1934
    %v1939 = vadd.f32 %v1721, %v1935
    %v1940 = vadd.f32 %v1722, %v1936
    %v1941 = vadd.f32 %v1723, %v1937
    %v1942 = vld [vmem:[%s11] sm:$0xff]
    %v1943 = vld [vmem:[%s11 + $0x8] sm:$0xff]
    %v1944 = vld [vmem:[%s11 + $0x10] sm:$0xff]
    %v1945 = vld [vmem:[%s11 + $0x18] sm:$0xff]
    %v1946 = vld [vmem:[%s12] sm:$0x1]
    %v1948 = vperm.slane %v1946, 0
    %v1951 = vsel %vm119, %v1938, 0
    %v1954 = vsel %vm119, %v1939, 0
    %v1957 = vsel %vm119, %v1940, 0
    %v1960 = vsel %vm119, %v1941, 0
    %1962 = vmatpush.msra.mxu0 0.0
    %1963 = vmatpush.msra.mxu0 0.0
    %1964 = vmatpush.msra.mxu0 0.0
    %1965 = vmatpush.msra.mxu0 0.0
    %1966 = vmatpush.msra.mxu0 0.0
    %1967 = vmatpush.msra.mxu0 0.0
    %1968 = vmatpush.msra.mxu0 0.0
    %1969 = vmatpush.msra.mxu0 0.0
    %1970 = vmatpush.msra.mxu0 0.0
    %1971 = vmatpush.msra.mxu0 0.0
    %1972 = vmatpush.msra.mxu0 0.0
    %1973 = vmatpush.msra.mxu0 0.0
    %1974 = vmatpush.msra.mxu0 %v1945
    %1975 = vmatpush.msra.mxu0 %v1944
    %1976 = vmatpush.msra.mxu0 %v1943
    %1977 = vmatpush.msra.mxu0 %v1942
    %1978 = vmatmul.f32.gmra.mxu0 %v1951
    %v1979 = vpop.f32.mrf.mxu0
    %v1980 = vadd.f32 %v1948, %v1979
    %1981 = vmatmul.f32.gmra.mxu0 %v1954
    %v1982 = vpop.f32.mrf.mxu0
    %v1983 = vadd.f32 %v1948, %v1982
    %1984 = vmatmul.f32.gmra.mxu0 %v1957
    %v1985 = vpop.f32.mrf.mxu0
    %v1986 = vadd.f32 %v1948, %v1985
    %1987 = vmatmul.f32.gmra.mxu0 %v1960
    %v1988 = vpop.f32.mrf.mxu0
    %v1989 = vadd.f32 %v1948, %v1988
    %1990 = vdwg.mxu0
    %v1991 = vmul.f32 %v1980, 0.5
    %v1992 = vmul.f32 %v1983, 0.5
    %v1993 = vmul.f32 %v1986, 0.5
    %v1994 = vmul.f32 %v1989, 0.5
    %v1995 = vtanh.pop %v1991
    %v1996 = vtanh.pop %v1992
    %v1997 = vtanh.pop %v1993
    %v1998 = vtanh.pop %v1994
    %v1999 = vadd.f32 %v1995, 1.0
    %v2000 = vadd.f32 %v1996, 1.0
    %v2001 = vadd.f32 %v1997, 1.0
    %v2002 = vadd.f32 %v1998, 1.0
    %v2003 = vmul.f32 %v1999, 0.5
    %v2004 = vmul.f32 %v2000, 0.5
    %v2005 = vmul.f32 %v2001, 0.5
    %v2006 = vmul.f32 %v2002, 0.5
    %2007 = vst.msk [vmem:[%s14] sm:$0xff] %vm61, %v2003
    %2008 = vst.msk [vmem:[%s14 + $0x8] sm:$0xff] %vm61, %v2004
    %2009 = vst.msk [vmem:[%s14 + $0x10] sm:$0xff] %vm61, %v2005
    %2010 = vst.msk [vmem:[%s14 + $0x18] sm:$0xff] %vm61, %v2006
    // Predicated region
    $region54: #{vlvae_forward.1} parent=1 // pred_check
      _
    $region55: #{vlvae_forward.1} parent=1 // pred_check_branch
      %2012 = sbr.rel (0) target = $region57
    $region56: #{vlvae_forward.1} parent=1 // pred_region
      %2014 = vsyncadd [#allocation3], 0
      %s2015 = sshll.u32 [#allocation2], 4
      %s2016 = int_to_ptr.vmem [resolvable:$true] %s2015
      %s2017 = sshll.u32 %s13, 4
      %s2018 = int_to_ptr.hbm [resolvable:$true] %s2017
      %2023 = dma.vmem_to_hbm [thread:$0]  %s2016, 512, %s2018, [#allocation3], 128, 128, 8
    $region57: #{vlvae_forward.1} parent=1 // pred_fallthru
      _
    // Predicated region
    $region58: #{vlvae_forward.1} parent=1 // pred_check
      _
    $region59: #{vlvae_forward.1} parent=1 // pred_check_branch
      %2025 = sbr.rel (0) target = $region61
    $region60: #{vlvae_forward.1} parent=1 // pred_region
      _
    $region61: #{vlvae_forward.1} parent=1 // pred_fallthru
      _
    // Predicated region
    $region62: #{vlvae_forward.1} parent=1 // pred_check
      _
    $region63: #{vlvae_forward.1} parent=1 // pred_check_branch
      %2027 = sbr.rel (0) target = $region65
    $region64: #{vlvae_forward.1} parent=1 // pred_region
      %2029 = dma.done [#allocation3], 512
    $region65: #{vlvae_forward.1} parent=1 // pred_fallthru
      _
    // Predicated region
    $region66: #{vlvae_forward.1} parent=1 // pred_check
      _
    $region67: #{vlvae_forward.1} parent=1 // pred_check_branch
      %2031 = sbr.rel (0) target = $region69
    $region68: #{vlvae_forward.1} parent=1 // pred_region
      _
    $region69: #{vlvae_forward.1} parent=1 // pred_fallthru
      _
    %2032 = vsyncpa [#allocation3], 1

</llo_original>
